<compile_context>
chip_gen: v7x
topology: tpu7x:2x2x1
jax: 0.10.0
libtpu: 0.0.40
codegen_flags: <defaults>
</compile_context>

<pallas_src>
import functools
import math

import jax
import jax.numpy as jnp
from jax.experimental import pallas as pl
from jax.experimental.pallas import tpu as pltpu


# ---------------------------------------------------------------------------
# Kernel
# ---------------------------------------------------------------------------

def _lstm_gate_math(gates, c, hidden):
    """PyTorch LSTM cell (gate order i, f, g, o), f32 math.
    sigmoid(x) == 0.5*(tanh(0.5*x)+1): 1 EUP pass per gate vs exp+reciprocal."""
    H = hidden
    i_g = 0.5 * (jnp.tanh(0.5 * gates[:, 0 * H:1 * H]) + 1.0)
    f_g = 0.5 * (jnp.tanh(0.5 * gates[:, 1 * H:2 * H]) + 1.0)
    g_g = jnp.tanh(gates[:, 2 * H:3 * H])
    o_g = 0.5 * (jnp.tanh(0.5 * gates[:, 3 * H:4 * H]) + 1.0)
    c_new = f_g * c + i_g * g_g
    h_new = o_g * jnp.tanh(c_new)
    return h_new, c_new


def _bilstm_block_kernel(gxf_ref, gxb_ref, whf_ref, whb_ref,
                         outf_ref, outb_ref,
                         hf_scr, hb_scr, cf_scr, cb_scr,
                         *, num_steps, hidden):
    """Fused forward+backward LSTM recurrence over one block of timesteps.

    Grid: (time-block index,)  -- strictly sequential ("arbitrary").

    gxf_ref : (Tb, B, 4H)  x_t @ W_ih_fwd^T + b_fwd          (forward time)
    gxb_ref : (Tb, B, 4H)  same for the backward direction, PRE-FLIPPED in
                           time, so the recurrence walks it 0..Tb-1 too.
    whf/whb : (H, 4H)      per-direction hidden->gate weights (resident).
    outf_ref: (Tb, B, H)   forward hidden states, forward time order.
    outb_ref: (Tb, B, H)   backward hidden states; the block index_map is
                           reversed and we write within-block position
                           Tb-1-s, so rows land in original time order.
    h*/c*   : (B, H)       carried state (h in matmul dtype, c in f32).
    """
    H = hidden

    @pl.when(pl.program_id(0) == 0)
    def _():
        hf_scr[...] = jnp.zeros_like(hf_scr)
        hb_scr[...] = jnp.zeros_like(hb_scr)
        cf_scr[...] = jnp.zeros_like(cf_scr)
        cb_scr[...] = jnp.zeros_like(cb_scr)

    w_f = whf_ref[...]          # (H, 4H), resident across the whole sweep
    w_b = whb_ref[...]

    h_f = hf_scr[...]
    h_b = hb_scr[...]
    c_f = cf_scr[...]
    c_b = cb_scr[...]

    # Fully unrolled (Tb is capped so live ranges stay small): static indices
    # everywhere, and both directions' MXU/EUP work interleaves per step.
    for s in range(num_steps):
        gates_f = gxf_ref[s].astype(jnp.float32) + jnp.dot(
            h_f, w_f, preferred_element_type=jnp.float32)
        gates_b = gxb_ref[s].astype(jnp.float32) + jnp.dot(
            h_b, w_b, preferred_element_type=jnp.float32)

        hf32, c_f = _lstm_gate_math(gates_f, c_f, H)
        hb32, c_b = _lstm_gate_math(gates_b, c_b, H)

        h_f = hf32.astype(hf_scr.dtype)          # matmul-dtype recurrent h
        h_b = hb32.astype(hb_scr.dtype)

        outf_ref[s] = hf32.astype(outf_ref.dtype)
        outb_ref[num_steps - 1 - s] = hb32.astype(outb_ref.dtype)

    hf_scr[...] = h_f
    hb_scr[...] = h_b
    cf_scr[...] = c_f
    cb_scr[...] = c_b


# ---------------------------------------------------------------------------
# Time-block / VMEM sizing
# ---------------------------------------------------------------------------

def _choose_time_block(T, B, H, gx_bytes, out_bytes,
                       vmem_budget_bytes=12 * 1024 * 1024):
    """Largest Tb whose double-buffered gx/out blocks fit the budget, with an
    unroll cap so the fully-unrolled inner loop doesn't blow register live
    ranges.  Prefers a divisor of T; otherwise T is padded up."""
    per_step = 2 * (2 * B * 4 * H * gx_bytes) + 2 * (2 * B * H * out_bytes)
    cap = max(1, vmem_budget_bytes // max(per_step, 1))

    gates_vregs = max(1, (B * 4 * H * 4) // (8 * 128 * 4))
    if gates_vregs <= 16:
        unroll_cap = 32
    elif gates_vregs <= 64:
        unroll_cap = 16
    else:
        unroll_cap = 8

    cap = int(min(cap, unroll_cap, T))
    for tb in range(cap, 0, -1):
        if T % tb == 0 and tb * 2 > cap:
            return tb, T                      # clean divisor, no padding
    tb = cap
    t_pad = ((T + tb - 1) // tb) * tb         # pad T (zero-gx steps are inert
    return tb, t_pad                          # for zero init state / sliced off)


# ---------------------------------------------------------------------------
# One bidirectional LSTM layer
# ---------------------------------------------------------------------------

def bidirectional_lstm_layer(x_parts, w_ih_t, w_hh_t, bias, *, out_dtype):
    """x_parts: tuple of (T, B, C_i) arrays whose feature-concat is the layer
    input (so the previous layer never has to materialize a concat).

    w_ih_t : (2, I, 4H)   stacked [fwd, bwd] input->gate weights (transposed)
    w_hh_t : (2, H, 4H)   stacked [fwd, bwd] hidden->gate weights (transposed)
    bias   : (2, 4H)      f32, b_ih + b_hh per direction
    Returns (out_fwd, out_bwd): two (T, B, H) arrays in `out_dtype`.
    """
    T, B = x_parts[0].shape[:2]
    H = w_hh_t.shape[-2]
    gx_dtype = w_ih_t.dtype                      # bf16 by default
    gx_bytes = jnp.dtype(gx_dtype).itemsize
    out_bytes = jnp.dtype(out_dtype).itemsize
    whh_bytes = jnp.dtype(w_hh_t.dtype).itemsize

    # --- Hoisted, time-independent input projection (one big MXU matmul per
    # direction, done by XLA).  Backward direction consumes time-flipped x so
    # the kernel walks both directions 0..Tb-1 with static indices. ---
    def proj(parts, w):
        off, acc = 0, None
        for p in parts:
            C = p.shape[-1]
            term = jnp.einsum('tbc,cg->tbg', p.astype(w.dtype), w[off:off + C],
                              preferred_element_type=jnp.float32)
            acc = term if acc is None else acc + term
            off += C
        return acc

    gx_f = (proj(x_parts, w_ih_t[0]) + bias[0]).astype(gx_dtype)
    gx_b = (proj([jnp.flip(p, axis=0) for p in x_parts], w_ih_t[1])
            + bias[1]).astype(gx_dtype)

    Tb, T_pad = _choose_time_block(T, B, H, gx_bytes, out_bytes)
    nT = T_pad // Tb
    if T_pad != T:
        pad = jnp.zeros((T_pad - T, B, 4 * H), gx_dtype)
        gx_f = jnp.concatenate([gx_f, pad], axis=0)
        gx_b = jnp.concatenate([gx_b, pad], axis=0)

    # Explicit VMEM limit (review item): blocks + resident weights + scratch.
    need = (2 * (2 * Tb * B * 4 * H * gx_bytes)
            + 2 * (2 * Tb * B * H * out_bytes)
            + 2 * (2 * H * 4 * H * whh_bytes)
            + 2 * B * H * (whh_bytes + 4))
    vmem_limit = int(min(max(2 * need + (2 << 20), 16 << 20), 48 << 20))

    kernel = functools.partial(_bilstm_block_kernel, num_steps=Tb, hidden=H)

    out_f, out_b = pl.pallas_call(
        kernel,
        out_shape=(jax.ShapeDtypeStruct((T_pad, B, H), out_dtype),
                   jax.ShapeDtypeStruct((T_pad, B, H), out_dtype)),
        grid_spec=pltpu.PrefetchScalarGridSpec(
            num_scalar_prefetch=0,
            grid=(nT,),
            in_specs=[
                pl.BlockSpec((Tb, B, 4 * H), lambda t: (t, 0, 0)),      # gx fwd
                pl.BlockSpec((Tb, B, 4 * H), lambda t: (t, 0, 0)),      # gx bwd (flipped)
                pl.BlockSpec((H, 4 * H), lambda t: (0, 0)),             # W_hh fwd
                pl.BlockSpec((H, 4 * H), lambda t: (0, 0)),             # W_hh bwd
            ],
            out_specs=[
                pl.BlockSpec((Tb, B, H), lambda t: (t, 0, 0)),          # fwd, forward time
                pl.BlockSpec((Tb, B, H), lambda t: (nT - 1 - t, 0, 0)),  # bwd, un-flipped
            ],
            scratch_shapes=[
                pltpu.VMEM((B, H), w_hh_t.dtype),   # h fwd (matmul dtype)
                pltpu.VMEM((B, H), w_hh_t.dtype),   # h bwd
                pltpu.VMEM((B, H), jnp.float32),    # c fwd
                pltpu.VMEM((B, H), jnp.float32),    # c bwd
            ],
        ),
        compiler_params=pltpu.CompilerParams(
            dimension_semantics=("arbitrary",),     # true recurrence over time
            vmem_limit_bytes=vmem_limit),
    )(gx_f, gx_b, w_hh_t[0], w_hh_t[1])

    if T_pad != T:
        out_f = out_f[:T]
        out_b = out_b[T_pad - T:]        # real backward rows occupy the tail
    return out_f, out_b


# ---------------------------------------------------------------------------
# Encoder (Embedding + multi-layer bidirectional LSTM)
# ---------------------------------------------------------------------------

class EncoderPallas:
    """JAX/Pallas port of the PyTorch Encoder (Embedding + bidirectional LSTM)."""

    def __init__(self, vocab_size, embed_size, hidden_size, num_layers,
                 dpt=0.2, key=None, matmul_dtype=jnp.bfloat16):
        self.vocab_size = vocab_size
        self.embed_size = embed_size
        self.hidden_size = hidden_size
        self.num_layers = num_layers
        self.matmul_dtype = matmul_dtype
        # TODO(synk): nn.LSTM inter-layer dropout (training-mode only,
        # stochastic) is not applied; this matches eval-mode semantics.

        if key is None:
            key = jax.random.PRNGKey(0)
        k_emb, key = jax.random.split(key)

        # Embedding: PyTorch init ~ N(0, 1). Kept f32.
        self.embedding = jax.random.normal(
            k_emb, (vocab_size, embed_size), dtype=jnp.float32)

        # LSTM weights: PyTorch init ~ U(-k, k), k = 1/sqrt(hidden_size).
        bound = 1.0 / math.sqrt(hidden_size)
        H = hidden_size
        self.layers = []
        for layer in range(num_layers):
            in_size = embed_size if layer == 0 else 2 * hidden_size
            w_ih_d, w_hh_d, bias_d = [], [], []
            for _direction in range(2):                 # 0 = fwd, 1 = bwd
                key, k1, k2, k3, k4 = jax.random.split(key, 5)
                w_ih = jax.random.uniform(
                    k1, (4 * H, in_size), jnp.float32, -bound, bound)
                w_hh = jax.random.uniform(
                    k2, (4 * H, H), jnp.float32, -bound, bound)
                b_ih = jax.random.uniform(
                    k3, (4 * H,), jnp.float32, -bound, bound)
                b_hh = jax.random.uniform(
                    k4, (4 * H,), jnp.float32, -bound, bound)
                w_ih_d.append(w_ih.T)                   # (I, 4H)
                w_hh_d.append(w_hh.T)                   # (H, 4H)
                bias_d.append(b_ih + b_hh)              # (4H,)
            self.layers.append({
                # matmul operands in matmul_dtype (bf16 default); bias/state/
                # gate math stay f32.
                "w_ih_t": jnp.stack(w_ih_d).astype(matmul_dtype),  # (2, I, 4H)
                "w_hh_t": jnp.stack(w_hh_d).astype(matmul_dtype),  # (2, H, 4H)
                "bias": jnp.stack(bias_d).astype(jnp.float32),     # (2, 4H)
            })

    def __call__(self, x):
        """x: int32 token ids, shape (T, B). Returns (T, B, 2*hidden) f32."""
        T, B = x.shape
        # TODO(synk): the embedding gather could be fused into the first
        # layer's kernel via scalar-prefetched token ids; kept in plain XLA.
        inp_parts = (self.embedding[x],)                # (T, B, E) f32

        # Pad batch to a multiple of 8 (f32 sublane) for dense stores; the
        # extra rows compute harmless finite values and are sliced at the end.
        # TODO(synk): H padding to a multiple of 128 (lane-dense gates) is not
        # applied; choose hidden_size % 128 == 0 for peak performance.
        B_pad = ((B + 7) // 8) * 8
        if B_pad != B:
            inp_parts = tuple(
                jnp.pad(p, ((0, 0), (0, B_pad - B), (0, 0))) for p in inp_parts)

        for li, p in enumerate(self.layers):
            is_last = li == len(self.layers) - 1
            out_dtype = jnp.float32 if is_last else self.matmul_dtype
            inp_parts = bidirectional_lstm_layer(
                inp_parts, p["w_ih_t"], p["w_hh_t"], p["bias"],
                out_dtype=out_dtype)

        # Single concat for the whole encoder (PyTorch layout: [fwd, bwd]).
        out = jnp.concatenate(inp_parts, axis=-1)       # (T, B_pad, 2H) f32
        if B_pad != B:
            out = out[:, :B]
        return out


if __name__ == "__main__":
    # Small, forward-consistent shapes (PyTorch seq-first convention).
    vocab_size = 50
    embed_size = 32
    hidden_size = 32
    num_layers = 2
    seq_len = 8
    batch = 2

    key = jax.random.PRNGKey(0)
    k_tok, k_params = jax.random.split(key)

    encoder = EncoderPallas(vocab_size, embed_size, hidden_size, num_layers,
                            key=k_params)

    x_tokens = jax.random.randint(k_tok, (seq_len, batch), 0, vocab_size,
                                  dtype=jnp.int32)

    out = jax.block_until_ready(encoder(x_tokens))

    assert out.shape == (seq_len, batch, 2 * hidden_size), out.shape
    assert out.dtype == jnp.float32
    assert bool(jnp.all(jnp.isfinite(out)))
    print("KERNEL_OK")
</pallas_src>

<mosaic_0001>
module attributes {stable_mosaic.version = 11 : i64} {
  func.func @_bilstm_block_kernel(%arg0: i32, %arg1: memref<8x8x128xbf16, #tpu.memory_space<vmem>>, %arg2: memref<8x8x128xbf16, #tpu.memory_space<vmem>>, %arg3: memref<32x128xbf16, #tpu.memory_space<vmem>>, %arg4: memref<32x128xbf16, #tpu.memory_space<vmem>>, %arg5: memref<8x8x32xbf16, #tpu.memory_space<vmem>>, %arg6: memref<8x8x32xbf16, #tpu.memory_space<vmem>>, %arg7: memref<8x32xbf16, #tpu.memory_space<vmem>>, %arg8: memref<8x32xbf16, #tpu.memory_space<vmem>>, %arg9: memref<8x32xf32, #tpu.memory_space<vmem>>, %arg10: memref<8x32xf32, #tpu.memory_space<vmem>>) attributes {dimension_semantics = [#tpu.dimension_semantics<arbitrary>], iteration_bounds = array<i64: 1>, scalar_prefetch = 0 : i64, scratch_operands = 4 : i64, tpu.core_type = #tpu.core_type<tc>, window_params = [{transform_indices = @transform_0, window_bounds = array<i64: 8, 8, 128>}, {transform_indices = @transform_1, window_bounds = array<i64: 8, 8, 128>}, {pipeline_mode = #tpu.pipeline_mode<synchronous>, transform_indices = @transform_2, window_bounds = array<i64: 32, 128>}, {pipeline_mode = #tpu.pipeline_mode<synchronous>, transform_indices = @transform_3, window_bounds = array<i64: 32, 128>}, {transform_indices = @transform_4, window_bounds = array<i64: 8, 8, 32>}, {transform_indices = @transform_5, window_bounds = array<i64: 8, 8, 32>}]} {
    %c0_i32 = arith.constant 0 : i32
    %0 = arith.cmpi eq, %arg0, %c0_i32 : i32
    %1 = arith.extui %0 : i1 to i32
    %c0_i32_0 = arith.constant 0 : i32
    %2 = arith.cmpi ne, %1, %c0_i32_0 : i32
    scf.if %2 {
      %cst_268 = arith.constant 0.000000e+00 : bf16
      %669 = vector.broadcast %cst_268 : bf16 to vector<8x32xbf16>
      %c0_269 = arith.constant 0 : index
      %c0_270 = arith.constant 0 : index
      %670 = vector.load %arg7[%c0_269, %c0_270] : memref<8x32xbf16, #tpu.memory_space<vmem>>, vector<8x32xbf16>
      tpu.vector_store %arg7[%c0_269, %c0_270], %669 {strides = array<i32>} : memref<8x32xbf16, #tpu.memory_space<vmem>>, vector<8x32xbf16>,
      %cst_271 = arith.constant 0.000000e+00 : bf16
      %671 = vector.broadcast %cst_271 : bf16 to vector<8x32xbf16>
      %c0_272 = arith.constant 0 : index
      %c0_273 = arith.constant 0 : index
      %672 = vector.load %arg8[%c0_272, %c0_273] : memref<8x32xbf16, #tpu.memory_space<vmem>>, vector<8x32xbf16>
      tpu.vector_store %arg8[%c0_272, %c0_273], %671 {strides = array<i32>} : memref<8x32xbf16, #tpu.memory_space<vmem>>, vector<8x32xbf16>,
      %cst_274 = arith.constant 0.000000e+00 : f32
      %673 = vector.broadcast %cst_274 : f32 to vector<8x32xf32>
      %c0_275 = arith.constant 0 : index
      %c0_276 = arith.constant 0 : index
      %674 = vector.load %arg9[%c0_275, %c0_276] : memref<8x32xf32, #tpu.memory_space<vmem>>, vector<8x32xf32>
      tpu.vector_store %arg9[%c0_275, %c0_276], %673 {strides = array<i32>} : memref<8x32xf32, #tpu.memory_space<vmem>>, vector<8x32xf32>,
      %cst_277 = arith.constant 0.000000e+00 : f32
      %675 = vector.broadcast %cst_277 : f32 to vector<8x32xf32>
      %c0_278 = arith.constant 0 : index
      %c0_279 = arith.constant 0 : index
      %676 = vector.load %arg10[%c0_278, %c0_279] : memref<8x32xf32, #tpu.memory_space<vmem>>, vector<8x32xf32>
      tpu.vector_store %arg10[%c0_278, %c0_279], %675 {strides = array<i32>} : memref<8x32xf32, #tpu.memory_space<vmem>>, vector<8x32xf32>,
    } else {
    }
    %c0 = arith.constant 0 : index
    %c0_1 = arith.constant 0 : index
    %3 = vector.load %arg3[%c0, %c0_1] : memref<32x128xbf16, #tpu.memory_space<vmem>>, vector<32x128xbf16>
    %c0_2 = arith.constant 0 : index
    %c0_3 = arith.constant 0 : index
    %4 = vector.load %arg4[%c0_2, %c0_3] : memref<32x128xbf16, #tpu.memory_space<vmem>>, vector<32x128xbf16>
    %c0_4 = arith.constant 0 : index
    %c0_5 = arith.constant 0 : index
    %5 = vector.load %arg7[%c0_4, %c0_5] : memref<8x32xbf16, #tpu.memory_space<vmem>>, vector<8x32xbf16>
    %c0_6 = arith.constant 0 : index
    %c0_7 = arith.constant 0 : index
    %6 = vector.load %arg8[%c0_6, %c0_7] : memref<8x32xbf16, #tpu.memory_space<vmem>>, vector<8x32xbf16>
    %c0_8 = arith.constant 0 : index
    %c0_9 = arith.constant 0 : index
    %7 = vector.load %arg9[%c0_8, %c0_9] : memref<8x32xf32, #tpu.memory_space<vmem>>, vector<8x32xf32>
    %c0_10 = arith.constant 0 : index
    %c0_11 = arith.constant 0 : index
    %8 = vector.load %arg10[%c0_10, %c0_11] : memref<8x32xf32, #tpu.memory_space<vmem>>, vector<8x32xf32>
    %c0_12 = arith.constant 0 : index
    %c0_13 = arith.constant 0 : index
    %c0_14 = arith.constant 0 : index
    %9 = vector.load %arg1[%c0_12, %c0_13, %c0_14] : memref<8x8x128xbf16, #tpu.memory_space<vmem>>, vector<1x8x128xbf16>
    %10 = vector.shape_cast %9 : vector<1x8x128xbf16> to vector<8x128xbf16>
    %11 = arith.extf %10 : vector<8x128xbf16> to vector<8x128xf32>
    %cst = arith.constant dense<0.000000e+00> : vector<8x128xf32>
    %12 = tpu.matmul %5, %3, %cst {dimension_numbers = #tpu.dot_dimension_numbers<[1], [0], [0], [1], [0, 0, 1, 1], [], []>} : vector<8x32xbf16>, vector<32x128xbf16>, vector<8x128xf32> -> vector<8x128xf32>
    %13 = arith.addf %11, %12 : vector<8x128xf32>
    %c0_15 = arith.constant 0 : index
    %c0_16 = arith.constant 0 : index
    %c0_17 = arith.constant 0 : index
    %14 = vector.load %arg2[%c0_15, %c0_16, %c0_17] : memref<8x8x128xbf16, #tpu.memory_space<vmem>>, vector<1x8x128xbf16>
    %15 = vector.shape_cast %14 : vector<1x8x128xbf16> to vector<8x128xbf16>
    %16 = arith.extf %15 : vector<8x128xbf16> to vector<8x128xf32>
    %cst_18 = arith.constant dense<0.000000e+00> : vector<8x128xf32>
    %17 = tpu.matmul %6, %4, %cst_18 {dimension_numbers = #tpu.dot_dimension_numbers<[1], [0], [0], [1], [0, 0, 1, 1], [], []>} : vector<8x32xbf16>, vector<32x128xbf16>, vector<8x128xf32> -> vector<8x128xf32>
    %18 = arith.addf %16, %17 : vector<8x128xf32>
    %19 = vector.extract_strided_slice %13 {offsets = [0, 0], sizes = [8, 32], strides = [1, 1]} : vector<8x128xf32> to vector<8x32xf32>
    %cst_19 = arith.constant 5.000000e-01 : f32
    %20 = vector.broadcast %cst_19 : f32 to vector<8x32xf32>
    %21 = arith.mulf %20, %19 : vector<8x32xf32>
    %22 = math.tanh %21 : vector<8x32xf32>
    %cst_20 = arith.constant 1.000000e+00 : f32
    %23 = vector.broadcast %cst_20 : f32 to vector<8x32xf32>
    %24 = arith.addf %22, %23 : vector<8x32xf32>
    %cst_21 = arith.constant 5.000000e-01 : f32
    %25 = vector.broadcast %cst_21 : f32 to vector<8x32xf32>
    %26 = arith.mulf %25, %24 : vector<8x32xf32>
    %27 = vector.extract_strided_slice %13 {offsets = [0, 32], sizes = [8, 32], strides = [1, 1]} : vector<8x128xf32> to vector<8x32xf32>
    %cst_22 = arith.constant 5.000000e-01 : f32
    %28 = vector.broadcast %cst_22 : f32 to vector<8x32xf32>
    %29 = arith.mulf %28, %27 : vector<8x32xf32>
    %30 = math.tanh %29 : vector<8x32xf32>
    %cst_23 = arith.constant 1.000000e+00 : f32
    %31 = vector.broadcast %cst_23 : f32 to vector<8x32xf32>
    %32 = arith.addf %30, %31 : vector<8x32xf32>
    %cst_24 = arith.constant 5.000000e-01 : f32
    %33 = vector.broadcast %cst_24 : f32 to vector<8x32xf32>
    %34 = arith.mulf %33, %32 : vector<8x32xf32>
    %35 = vector.extract_strided_slice %13 {offsets = [0, 64], sizes = [8, 32], strides = [1, 1]} : vector<8x128xf32> to vector<8x32xf32>
    %36 = math.tanh %35 : vector<8x32xf32>
    %37 = vector.extract_strided_slice %13 {offsets = [0, 96], sizes = [8, 32], strides = [1, 1]} : vector<8x128xf32> to vector<8x32xf32>
    %cst_25 = arith.constant 5.000000e-01 : f32
    %38 = vector.broadcast %cst_25 : f32 to vector<8x32xf32>
    %39 = arith.mulf %38, %37 : vector<8x32xf32>
    %40 = math.tanh %39 : vector<8x32xf32>
    %cst_26 = arith.constant 1.000000e+00 : f32
    %41 = vector.broadcast %cst_26 : f32 to vector<8x32xf32>
    %42 = arith.addf %40, %41 : vector<8x32xf32>
    %cst_27 = arith.constant 5.000000e-01 : f32
    %43 = vector.broadcast %cst_27 : f32 to vector<8x32xf32>
    %44 = arith.mulf %43, %42 : vector<8x32xf32>
    %45 = arith.mulf %34, %7 : vector<8x32xf32>
    %46 = arith.mulf %26, %36 : vector<8x32xf32>
    %47 = arith.addf %45, %46 : vector<8x32xf32>
    %48 = math.tanh %47 : vector<8x32xf32>
    %49 = arith.mulf %44, %48 : vector<8x32xf32>
    %50 = vector.extract_strided_slice %18 {offsets = [0, 0], sizes = [8, 32], strides = [1, 1]} : vector<8x128xf32> to vector<8x32xf32>
    %cst_28 = arith.constant 5.000000e-01 : f32
    %51 = vector.broadcast %cst_28 : f32 to vector<8x32xf32>
    %52 = arith.mulf %51, %50 : vector<8x32xf32>
    %53 = math.tanh %52 : vector<8x32xf32>
    %cst_29 = arith.constant 1.000000e+00 : f32
    %54 = vector.broadcast %cst_29 : f32 to vector<8x32xf32>
    %55 = arith.addf %53, %54 : vector<8x32xf32>
    %cst_30 = arith.constant 5.000000e-01 : f32
    %56 = vector.broadcast %cst_30 : f32 to vector<8x32xf32>
    %57 = arith.mulf %56, %55 : vector<8x32xf32>
    %58 = vector.extract_strided_slice %18 {offsets = [0, 32], sizes = [8, 32], strides = [1, 1]} : vector<8x128xf32> to vector<8x32xf32>
    %cst_31 = arith.constant 5.000000e-01 : f32
    %59 = vector.broadcast %cst_31 : f32 to vector<8x32xf32>
    %60 = arith.mulf %59, %58 : vector<8x32xf32>
    %61 = math.tanh %60 : vector<8x32xf32>
    %cst_32 = arith.constant 1.000000e+00 : f32
    %62 = vector.broadcast %cst_32 : f32 to vector<8x32xf32>
    %63 = arith.addf %61, %62 : vector<8x32xf32>
    %cst_33 = arith.constant 5.000000e-01 : f32
    %64 = vector.broadcast %cst_33 : f32 to vector<8x32xf32>
    %65 = arith.mulf %64, %63 : vector<8x32xf32>
    %66 = vector.extract_strided_slice %18 {offsets = [0, 64], sizes = [8, 32], strides = [1, 1]} : vector<8x128xf32> to vector<8x32xf32>
    %67 = math.tanh %66 : vector<8x32xf32>
    %68 = vector.extract_strided_slice %18 {offsets = [0, 96], sizes = [8, 32], strides = [1, 1]} : vector<8x128xf32> to vector<8x32xf32>
    %cst_34 = arith.constant 5.000000e-01 : f32
    %69 = vector.broadcast %cst_34 : f32 to vector<8x32xf32>
    %70 = arith.mulf %69, %68 : vector<8x32xf32>
    %71 = math.tanh %70 : vector<8x32xf32>
    %cst_35 = arith.constant 1.000000e+00 : f32
    %72 = vector.broadcast %cst_35 : f32 to vector<8x32xf32>
    %73 = arith.addf %71, %72 : vector<8x32xf32>
    %cst_36 = arith.constant 5.000000e-01 : f32
    %74 = vector.broadcast %cst_36 : f32 to vector<8x32xf32>
    %75 = arith.mulf %74, %73 : vector<8x32xf32>
    %76 = arith.mulf %65, %8 : vector<8x32xf32>
    %77 = arith.mulf %57, %67 : vector<8x32xf32>
    %78 = arith.addf %76, %77 : vector<8x32xf32>
    %79 = math.tanh %78 : vector<8x32xf32>
    %80 = arith.mulf %75, %79 : vector<8x32xf32>
    %81 = arith.truncf %49 : vector<8x32xf32> to vector<8x32xbf16>
    %82 = arith.truncf %80 : vector<8x32xf32> to vector<8x32xbf16>
    %83 = arith.truncf %49 : vector<8x32xf32> to vector<8x32xbf16>
    %c0_37 = arith.constant 0 : index
    %c0_38 = arith.constant 0 : index
    %c0_39 = arith.constant 0 : index
    %84 = vector.load %arg5[%c0_37, %c0_38, %c0_39] : memref<8x8x32xbf16, #tpu.memory_space<vmem>>, vector<1x8x32xbf16>
    %85 = vector.shape_cast %84 : vector<1x8x32xbf16> to vector<8x32xbf16>
    %86 = vector.shape_cast %83 : vector<8x32xbf16> to vector<1x8x32xbf16>
    tpu.vector_store %arg5[%c0_37, %c0_38, %c0_39], %86 {strides = array<i32>} : memref<8x8x32xbf16, #tpu.memory_space<vmem>>, vector<1x8x32xbf16>,
    %87 = arith.truncf %80 : vector<8x32xf32> to vector<8x32xbf16>
    %c7 = arith.constant 7 : index
    %c0_40 = arith.constant 0 : index
    %c0_41 = arith.constant 0 : index
    %88 = vector.load %arg6[%c7, %c0_40, %c0_41] : memref<8x8x32xbf16, #tpu.memory_space<vmem>>, vector<1x8x32xbf16>
    %89 = vector.shape_cast %88 : vector<1x8x32xbf16> to vector<8x32xbf16>
    %90 = vector.shape_cast %87 : vector<8x32xbf16> to vector<1x8x32xbf16>
    tpu.vector_store %arg6[%c7, %c0_40, %c0_41], %90 {strides = array<i32>} : memref<8x8x32xbf16, #tpu.memory_space<vmem>>, vector<1x8x32xbf16>,
    %c1 = arith.constant 1 : index
    %c0_42 = arith.constant 0 : index
    %c0_43 = arith.constant 0 : index
    %91 = vector.load %arg1[%c1, %c0_42, %c0_43] : memref<8x8x128xbf16, #tpu.memory_space<vmem>>, vector<1x8x128xbf16>
    %92 = vector.shape_cast %91 : vector<1x8x128xbf16> to vector<8x128xbf16>
    %93 = arith.extf %92 : vector<8x128xbf16> to vector<8x128xf32>
    %cst_44 = arith.constant dense<0.000000e+00> : vector<8x128xf32>
    %94 = tpu.matmul %81, %3, %cst_44 {dimension_numbers = #tpu.dot_dimension_numbers<[1], [0], [0], [1], [0, 0, 1, 1], [], []>} : vector<8x32xbf16>, vector<32x128xbf16>, vector<8x128xf32> -> vector<8x128xf32>
    %95 = arith.addf %93, %94 : vector<8x128xf32>
    %c1_45 = arith.constant 1 : index
    %c0_46 = arith.constant 0 : index
    %c0_47 = arith.constant 0 : index
    %96 = vector.load %arg2[%c1_45, %c0_46, %c0_47] : memref<8x8x128xbf16, #tpu.memory_space<vmem>>, vector<1x8x128xbf16>
    %97 = vector.shape_cast %96 : vector<1x8x128xbf16> to vector<8x128xbf16>
    %98 = arith.extf %97 : vector<8x128xbf16> to vector<8x128xf32>
    %cst_48 = arith.constant dense<0.000000e+00> : vector<8x128xf32>
    %99 = tpu.matmul %82, %4, %cst_48 {dimension_numbers = #tpu.dot_dimension_numbers<[1], [0], [0], [1], [0, 0, 1, 1], [], []>} : vector<8x32xbf16>, vector<32x128xbf16>, vector<8x128xf32> -> vector<8x128xf32>
    %100 = arith.addf %98, %99 : vector<8x128xf32>
    %101 = vector.extract_strided_slice %95 {offsets = [0, 0], sizes = [8, 32], strides = [1, 1]} : vector<8x128xf32> to vector<8x32xf32>
    %cst_49 = arith.constant 5.000000e-01 : f32
    %102 = vector.broadcast %cst_49 : f32 to vector<8x32xf32>
    %103 = arith.mulf %102, %101 : vector<8x32xf32>
    %104 = math.tanh %103 : vector<8x32xf32>
    %cst_50 = arith.constant 1.000000e+00 : f32
    %105 = vector.broadcast %cst_50 : f32 to vector<8x32xf32>
    %106 = arith.addf %104, %105 : vector<8x32xf32>
    %cst_51 = arith.constant 5.000000e-01 : f32
    %107 = vector.broadcast %cst_51 : f32 to vector<8x32xf32>
    %108 = arith.mulf %107, %106 : vector<8x32xf32>
    %109 = vector.extract_strided_slice %95 {offsets = [0, 32], sizes = [8, 32], strides = [1, 1]} : vector<8x128xf32> to vector<8x32xf32>
    %cst_52 = arith.constant 5.000000e-01 : f32
    %110 = vector.broadcast %cst_52 : f32 to vector<8x32xf32>
    %111 = arith.mulf %110, %109 : vector<8x32xf32>
    %112 = math.tanh %111 : vector<8x32xf32>
    %cst_53 = arith.constant 1.000000e+00 : f32
    %113 = vector.broadcast %cst_53 : f32 to vector<8x32xf32>
    %114 = arith.addf %112, %113 : vector<8x32xf32>
    %cst_54 = arith.constant 5.000000e-01 : f32
    %115 = vector.broadcast %cst_54 : f32 to vector<8x32xf32>
    %116 = arith.mulf %115, %114 : vector<8x32xf32>
    %117 = vector.extract_strided_slice %95 {offsets = [0, 64], sizes = [8, 32], strides = [1, 1]} : vector<8x128xf32> to vector<8x32xf32>
    %118 = math.tanh %117 : vector<8x32xf32>
    %119 = vector.extract_strided_slice %95 {offsets = [0, 96], sizes = [8, 32], strides = [1, 1]} : vector<8x128xf32> to vector<8x32xf32>
    %cst_55 = arith.constant 5.000000e-01 : f32
    %120 = vector.broadcast %cst_55 : f32 to vector<8x32xf32>
    %121 = arith.mulf %120, %119 : vector<8x32xf32>
    %122 = math.tanh %121 : vector<8x32xf32>
    %cst_56 = arith.constant 1.000000e+00 : f32
    %123 = vector.broadcast %cst_56 : f32 to vector<8x32xf32>
    %124 = arith.addf %122, %123 : vector<8x32xf32>
    %cst_57 = arith.constant 5.000000e-01 : f32
    %125 = vector.broadcast %cst_57 : f32 to vector<8x32xf32>
    %126 = arith.mulf %125, %124 : vector<8x32xf32>
    %127 = arith.mulf %116, %47 : vector<8x32xf32>
    %128 = arith.mulf %108, %118 : vector<8x32xf32>
    %129 = arith.addf %127, %128 : vector<8x32xf32>
    %130 = math.tanh %129 : vector<8x32xf32>
    %131 = arith.mulf %126, %130 : vector<8x32xf32>
    %132 = vector.extract_strided_slice %100 {offsets = [0, 0], sizes = [8, 32], strides = [1, 1]} : vector<8x128xf32> to vector<8x32xf32>
    %cst_58 = arith.constant 5.000000e-01 : f32
    %133 = vector.broadcast %cst_58 : f32 to vector<8x32xf32>
    %134 = arith.mulf %133, %132 : vector<8x32xf32>
    %135 = math.tanh %134 : vector<8x32xf32>
    %cst_59 = arith.constant 1.000000e+00 : f32
    %136 = vector.broadcast %cst_59 : f32 to vector<8x32xf32>
    %137 = arith.addf %135, %136 : vector<8x32xf32>
    %cst_60 = arith.constant 5.000000e-01 : f32
    %138 = vector.broadcast %cst_60 : f32 to vector<8x32xf32>
    %139 = arith.mulf %138, %137 : vector<8x32xf32>
    %140 = vector.extract_strided_slice %100 {offsets = [0, 32], sizes = [8, 32], strides = [1, 1]} : vector<8x128xf32> to vector<8x32xf32>
    %cst_61 = arith.constant 5.000000e-01 : f32
    %141 = vector.broadcast %cst_61 : f32 to vector<8x32xf32>
    %142 = arith.mulf %141, %140 : vector<8x32xf32>
    %143 = math.tanh %142 : vector<8x32xf32>
    %cst_62 = arith.constant 1.000000e+00 : f32
    %144 = vector.broadcast %cst_62 : f32 to vector<8x32xf32>
    %145 = arith.addf %143, %144 : vector<8x32xf32>
    %cst_63 = arith.constant 5.000000e-01 : f32
    %146 = vector.broadcast %cst_63 : f32 to vector<8x32xf32>
    %147 = arith.mulf %146, %145 : vector<8x32xf32>
    %148 = vector.extract_strided_slice %100 {offsets = [0, 64], sizes = [8, 32], strides = [1, 1]} : vector<8x128xf32> to vector<8x32xf32>
    %149 = math.tanh %148 : vector<8x32xf32>
    %150 = vector.extract_strided_slice %100 {offsets = [0, 96], sizes = [8, 32], strides = [1, 1]} : vector<8x128xf32> to vector<8x32xf32>
    %cst_64 = arith.constant 5.000000e-01 : f32
    %151 = vector.broadcast %cst_64 : f32 to vector<8x32xf32>
    %152 = arith.mulf %151, %150 : vector<8x32xf32>
    %153 = math.tanh %152 : vector<8x32xf32>
    %cst_65 = arith.constant 1.000000e+00 : f32
    %154 = vector.broadcast %cst_65 : f32 to vector<8x32xf32>
    %155 = arith.addf %153, %154 : vector<8x32xf32>
    %cst_66 = arith.constant 5.000000e-01 : f32
    %156 = vector.broadcast %cst_66 : f32 to vector<8x32xf32>
    %157 = arith.mulf %156, %155 : vector<8x32xf32>
    %158 = arith.mulf %147, %78 : vector<8x32xf32>
    %159 = arith.mulf %139, %149 : vector<8x32xf32>
    %160 = arith.addf %158, %159 : vector<8x32xf32>
    %161 = math.tanh %160 : vector<8x32xf32>
    %162 = arith.mulf %157, %161 : vector<8x32xf32>
    %163 = arith.truncf %131 : vector<8x32xf32> to vector<8x32xbf16>
    %164 = arith.truncf %162 : vector<8x32xf32> to vector<8x32xbf16>
    %165 = arith.truncf %131 : vector<8x32xf32> to vector<8x32xbf16>
    %c1_67 = arith.constant 1 : index
    %c0_68 = arith.constant 0 : index
    %c0_69 = arith.constant 0 : index
    %166 = vector.load %arg5[%c1_67, %c0_68, %c0_69] : memref<8x8x32xbf16, #tpu.memory_space<vmem>>, vector<1x8x32xbf16>
    %167 = vector.shape_cast %166 : vector<1x8x32xbf16> to vector<8x32xbf16>
    %168 = vector.shape_cast %165 : vector<8x32xbf16> to vector<1x8x32xbf16>
    tpu.vector_store %arg5[%c1_67, %c0_68, %c0_69], %168 {strides = array<i32>} : memref<8x8x32xbf16, #tpu.memory_space<vmem>>, vector<1x8x32xbf16>,
    %169 = arith.truncf %162 : vector<8x32xf32> to vector<8x32xbf16>
    %c6 = arith.constant 6 : index
    %c0_70 = arith.constant 0 : index
    %c0_71 = arith.constant 0 : index
    %170 = vector.load %arg6[%c6, %c0_70, %c0_71] : memref<8x8x32xbf16, #tpu.memory_space<vmem>>, vector<1x8x32xbf16>
    %171 = vector.shape_cast %170 : vector<1x8x32xbf16> to vector<8x32xbf16>
    %172 = vector.shape_cast %169 : vector<8x32xbf16> to vector<1x8x32xbf16>
    tpu.vector_store %arg6[%c6, %c0_70, %c0_71], %172 {strides = array<i32>} : memref<8x8x32xbf16, #tpu.memory_space<vmem>>, vector<1x8x32xbf16>,
    %c2 = arith.constant 2 : index
    %c0_72 = arith.constant 0 : index
    %c0_73 = arith.constant 0 : index
    %173 = vector.load %arg1[%c2, %c0_72, %c0_73] : memref<8x8x128xbf16, #tpu.memory_space<vmem>>, vector<1x8x128xbf16>
    %174 = vector.shape_cast %173 : vector<1x8x128xbf16> to vector<8x128xbf16>
    %175 = arith.extf %174 : vector<8x128xbf16> to vector<8x128xf32>
    %cst_74 = arith.constant dense<0.000000e+00> : vector<8x128xf32>
    %176 = tpu.matmul %163, %3, %cst_74 {dimension_numbers = #tpu.dot_dimension_numbers<[1], [0], [0], [1], [0, 0, 1, 1], [], []>} : vector<8x32xbf16>, vector<32x128xbf16>, vector<8x128xf32> -> vector<8x128xf32>
    %177 = arith.addf %175, %176 : vector<8x128xf32>
    %c2_75 = arith.constant 2 : index
    %c0_76 = arith.constant 0 : index
    %c0_77 = arith.constant 0 : index
    %178 = vector.load %arg2[%c2_75, %c0_76, %c0_77] : memref<8x8x128xbf16, #tpu.memory_space<vmem>>, vector<1x8x128xbf16>
    %179 = vector.shape_cast %178 : vector<1x8x128xbf16> to vector<8x128xbf16>
    %180 = arith.extf %179 : vector<8x128xbf16> to vector<8x128xf32>
    %cst_78 = arith.constant dense<0.000000e+00> : vector<8x128xf32>
    %181 = tpu.matmul %164, %4, %cst_78 {dimension_numbers = #tpu.dot_dimension_numbers<[1], [0], [0], [1], [0, 0, 1, 1], [], []>} : vector<8x32xbf16>, vector<32x128xbf16>, vector<8x128xf32> -> vector<8x128xf32>
    %182 = arith.addf %180, %181 : vector<8x128xf32>
    %183 = vector.extract_strided_slice %177 {offsets = [0, 0], sizes = [8, 32], strides = [1, 1]} : vector<8x128xf32> to vector<8x32xf32>
    %cst_79 = arith.constant 5.000000e-01 : f32
    %184 = vector.broadcast %cst_79 : f32 to vector<8x32xf32>
    %185 = arith.mulf %184, %183 : vector<8x32xf32>
    %186 = math.tanh %185 : vector<8x32xf32>
    %cst_80 = arith.constant 1.000000e+00 : f32
    %187 = vector.broadcast %cst_80 : f32 to vector<8x32xf32>
    %188 = arith.addf %186, %187 : vector<8x32xf32>
    %cst_81 = arith.constant 5.000000e-01 : f32
    %189 = vector.broadcast %cst_81 : f32 to vector<8x32xf32>
    %190 = arith.mulf %189, %188 : vector<8x32xf32>
    %191 = vector.extract_strided_slice %177 {offsets = [0, 32], sizes = [8, 32], strides = [1, 1]} : vector<8x128xf32> to vector<8x32xf32>
    %cst_82 = arith.constant 5.000000e-01 : f32
    %192 = vector.broadcast %cst_82 : f32 to vector<8x32xf32>
    %193 = arith.mulf %192, %191 : vector<8x32xf32>
    %194 = math.tanh %193 : vector<8x32xf32>
    %cst_83 = arith.constant 1.000000e+00 : f32
    %195 = vector.broadcast %cst_83 : f32 to vector<8x32xf32>
    %196 = arith.addf %194, %195 : vector<8x32xf32>
    %cst_84 = arith.constant 5.000000e-01 : f32
    %197 = vector.broadcast %cst_84 : f32 to vector<8x32xf32>
    %198 = arith.mulf %197, %196 : vector<8x32xf32>
    %199 = vector.extract_strided_slice %177 {offsets = [0, 64], sizes = [8, 32], strides = [1, 1]} : vector<8x128xf32> to vector<8x32xf32>
    %200 = math.tanh %199 : vector<8x32xf32>
    %201 = vector.extract_strided_slice %177 {offsets = [0, 96], sizes = [8, 32], strides = [1, 1]} : vector<8x128xf32> to vector<8x32xf32>
    %cst_85 = arith.constant 5.000000e-01 : f32
    %202 = vector.broadcast %cst_85 : f32 to vector<8x32xf32>
    %203 = arith.mulf %202, %201 : vector<8x32xf32>
    %204 = math.tanh %203 : vector<8x32xf32>
    %cst_86 = arith.constant 1.000000e+00 : f32
    %205 = vector.broadcast %cst_86 : f32 to vector<8x32xf32>
    %206 = arith.addf %204, %205 : vector<8x32xf32>
    %cst_87 = arith.constant 5.000000e-01 : f32
    %207 = vector.broadcast %cst_87 : f32 to vector<8x32xf32>
    %208 = arith.mulf %207, %206 : vector<8x32xf32>
    %209 = arith.mulf %198, %129 : vector<8x32xf32>
    %210 = arith.mulf %190, %200 : vector<8x32xf32>
    %211 = arith.addf %209, %210 : vector<8x32xf32>
    %212 = math.tanh %211 : vector<8x32xf32>
    %213 = arith.mulf %208, %212 : vector<8x32xf32>
    %214 = vector.extract_strided_slice %182 {offsets = [0, 0], sizes = [8, 32], strides = [1, 1]} : vector<8x128xf32> to vector<8x32xf32>
    %cst_88 = arith.constant 5.000000e-01 : f32
    %215 = vector.broadcast %cst_88 : f32 to vector<8x32xf32>
    %216 = arith.mulf %215, %214 : vector<8x32xf32>
    %217 = math.tanh %216 : vector<8x32xf32>
    %cst_89 = arith.constant 1.000000e+00 : f32
    %218 = vector.broadcast %cst_89 : f32 to vector<8x32xf32>
    %219 = arith.addf %217, %218 : vector<8x32xf32>
    %cst_90 = arith.constant 5.000000e-01 : f32
    %220 = vector.broadcast %cst_90 : f32 to vector<8x32xf32>
    %221 = arith.mulf %220, %219 : vector<8x32xf32>
    %222 = vector.extract_strided_slice %182 {offsets = [0, 32], sizes = [8, 32], strides = [1, 1]} : vector<8x128xf32> to vector<8x32xf32>
    %cst_91 = arith.constant 5.000000e-01 : f32
    %223 = vector.broadcast %cst_91 : f32 to vector<8x32xf32>
    %224 = arith.mulf %223, %222 : vector<8x32xf32>
    %225 = math.tanh %224 : vector<8x32xf32>
    %cst_92 = arith.constant 1.000000e+00 : f32
    %226 = vector.broadcast %cst_92 : f32 to vector<8x32xf32>
    %227 = arith.addf %225, %226 : vector<8x32xf32>
    %cst_93 = arith.constant 5.000000e-01 : f32
    %228 = vector.broadcast %cst_93 : f32 to vector<8x32xf32>
    %229 = arith.mulf %228, %227 : vector<8x32xf32>
    %230 = vector.extract_strided_slice %182 {offsets = [0, 64], sizes = [8, 32], strides = [1, 1]} : vector<8x128xf32> to vector<8x32xf32>
    %231 = math.tanh %230 : vector<8x32xf32>
    %232 = vector.extract_strided_slice %182 {offsets = [0, 96], sizes = [8, 32], strides = [1, 1]} : vector<8x128xf32> to vector<8x32xf32>
    %cst_94 = arith.constant 5.000000e-01 : f32
    %233 = vector.broadcast %cst_94 : f32 to vector<8x32xf32>
    %234 = arith.mulf %233, %232 : vector<8x32xf32>
    %235 = math.tanh %234 : vector<8x32xf32>
    %cst_95 = arith.constant 1.000000e+00 : f32
    %236 = vector.broadcast %cst_95 : f32 to vector<8x32xf32>
    %237 = arith.addf %235, %236 : vector<8x32xf32>
    %cst_96 = arith.constant 5.000000e-01 : f32
    %238 = vector.broadcast %cst_96 : f32 to vector<8x32xf32>
    %239 = arith.mulf %238, %237 : vector<8x32xf32>
    %240 = arith.mulf %229, %160 : vector<8x32xf32>
    %241 = arith.mulf %221, %231 : vector<8x32xf32>
    %242 = arith.addf %240, %241 : vector<8x32xf32>
    %243 = math.tanh %242 : vector<8x32xf32>
    %244 = arith.mulf %239, %243 : vector<8x32xf32>
    %245 = arith.truncf %213 : vector<8x32xf32> to vector<8x32xbf16>
    %246 = arith.truncf %244 : vector<8x32xf32> to vector<8x32xbf16>
    %247 = arith.truncf %213 : vector<8x32xf32> to vector<8x32xbf16>
    %c2_97 = arith.constant 2 : index
    %c0_98 = arith.constant 0 : index
    %c0_99 = arith.constant 0 : index
    %248 = vector.load %arg5[%c2_97, %c0_98, %c0_99] : memref<8x8x32xbf16, #tpu.memory_space<vmem>>, vector<1x8x32xbf16>
    %249 = vector.shape_cast %248 : vector<1x8x32xbf16> to vector<8x32xbf16>
    %250 = vector.shape_cast %247 : vector<8x32xbf16> to vector<1x8x32xbf16>
    tpu.vector_store %arg5[%c2_97, %c0_98, %c0_99], %250 {strides = array<i32>} : memref<8x8x32xbf16, #tpu.memory_space<vmem>>, vector<1x8x32xbf16>,
    %251 = arith.truncf %244 : vector<8x32xf32> to vector<8x32xbf16>
    %c5 = arith.constant 5 : index
    %c0_100 = arith.constant 0 : index
    %c0_101 = arith.constant 0 : index
    %252 = vector.load %arg6[%c5, %c0_100, %c0_101] : memref<8x8x32xbf16, #tpu.memory_space<vmem>>, vector<1x8x32xbf16>
    %253 = vector.shape_cast %252 : vector<1x8x32xbf16> to vector<8x32xbf16>
    %254 = vector.shape_cast %251 : vector<8x32xbf16> to vector<1x8x32xbf16>
    tpu.vector_store %arg6[%c5, %c0_100, %c0_101], %254 {strides = array<i32>} : memref<8x8x32xbf16, #tpu.memory_space<vmem>>, vector<1x8x32xbf16>,
    %c3 = arith.constant 3 : index
    %c0_102 = arith.constant 0 : index
    %c0_103 = arith.constant 0 : index
    %255 = vector.load %arg1[%c3, %c0_102, %c0_103] : memref<8x8x128xbf16, #tpu.memory_space<vmem>>, vector<1x8x128xbf16>
    %256 = vector.shape_cast %255 : vector<1x8x128xbf16> to vector<8x128xbf16>
    %257 = arith.extf %256 : vector<8x128xbf16> to vector<8x128xf32>
    %cst_104 = arith.constant dense<0.000000e+00> : vector<8x128xf32>
    %258 = tpu.matmul %245, %3, %cst_104 {dimension_numbers = #tpu.dot_dimension_numbers<[1], [0], [0], [1], [0, 0, 1, 1], [], []>} : vector<8x32xbf16>, vector<32x128xbf16>, vector<8x128xf32> -> vector<8x128xf32>
    %259 = arith.addf %257, %258 : vector<8x128xf32>
    %c3_105 = arith.constant 3 : index
    %c0_106 = arith.constant 0 : index
    %c0_107 = arith.constant 0 : index
    %260 = vector.load %arg2[%c3_105, %c0_106, %c0_107] : memref<8x8x128xbf16, #tpu.memory_space<vmem>>, vector<1x8x128xbf16>
    %261 = vector.shape_cast %260 : vector<1x8x128xbf16> to vector<8x128xbf16>
    %262 = arith.extf %261 : vector<8x128xbf16> to vector<8x128xf32>
    %cst_108 = arith.constant dense<0.000000e+00> : vector<8x128xf32>
    %263 = tpu.matmul %246, %4, %cst_108 {dimension_numbers = #tpu.dot_dimension_numbers<[1], [0], [0], [1], [0, 0, 1, 1], [], []>} : vector<8x32xbf16>, vector<32x128xbf16>, vector<8x128xf32> -> vector<8x128xf32>
    %264 = arith.addf %262, %263 : vector<8x128xf32>
    %265 = vector.extract_strided_slice %259 {offsets = [0, 0], sizes = [8, 32], strides = [1, 1]} : vector<8x128xf32> to vector<8x32xf32>
    %cst_109 = arith.constant 5.000000e-01 : f32
    %266 = vector.broadcast %cst_109 : f32 to vector<8x32xf32>
    %267 = arith.mulf %266, %265 : vector<8x32xf32>
    %268 = math.tanh %267 : vector<8x32xf32>
    %cst_110 = arith.constant 1.000000e+00 : f32
    %269 = vector.broadcast %cst_110 : f32 to vector<8x32xf32>
    %270 = arith.addf %268, %269 : vector<8x32xf32>
    %cst_111 = arith.constant 5.000000e-01 : f32
    %271 = vector.broadcast %cst_111 : f32 to vector<8x32xf32>
    %272 = arith.mulf %271, %270 : vector<8x32xf32>
    %273 = vector.extract_strided_slice %259 {offsets = [0, 32], sizes = [8, 32], strides = [1, 1]} : vector<8x128xf32> to vector<8x32xf32>
    %cst_112 = arith.constant 5.000000e-01 : f32
    %274 = vector.broadcast %cst_112 : f32 to vector<8x32xf32>
    %275 = arith.mulf %274, %273 : vector<8x32xf32>
    %276 = math.tanh %275 : vector<8x32xf32>
    %cst_113 = arith.constant 1.000000e+00 : f32
    %277 = vector.broadcast %cst_113 : f32 to vector<8x32xf32>
    %278 = arith.addf %276, %277 : vector<8x32xf32>
    %cst_114 = arith.constant 5.000000e-01 : f32
    %279 = vector.broadcast %cst_114 : f32 to vector<8x32xf32>
    %280 = arith.mulf %279, %278 : vector<8x32xf32>
    %281 = vector.extract_strided_slice %259 {offsets = [0, 64], sizes = [8, 32], strides = [1, 1]} : vector<8x128xf32> to vector<8x32xf32>
    %282 = math.tanh %281 : vector<8x32xf32>
    %283 = vector.extract_strided_slice %259 {offsets = [0, 96], sizes = [8, 32], strides = [1, 1]} : vector<8x128xf32> to vector<8x32xf32>
    %cst_115 = arith.constant 5.000000e-01 : f32
    %284 = vector.broadcast %cst_115 : f32 to vector<8x32xf32>
    %285 = arith.mulf %284, %283 : vector<8x32xf32>
    %286 = math.tanh %285 : vector<8x32xf32>
    %cst_116 = arith.constant 1.000000e+00 : f32
    %287 = vector.broadcast %cst_116 : f32 to vector<8x32xf32>
    %288 = arith.addf %286, %287 : vector<8x32xf32>
    %cst_117 = arith.constant 5.000000e-01 : f32
    %289 = vector.broadcast %cst_117 : f32 to vector<8x32xf32>
    %290 = arith.mulf %289, %288 : vector<8x32xf32>
    %291 = arith.mulf %280, %211 : vector<8x32xf32>
    %292 = arith.mulf %272, %282 : vector<8x32xf32>
    %293 = arith.addf %291, %292 : vector<8x32xf32>
    %294 = math.tanh %293 : vector<8x32xf32>
    %295 = arith.mulf %290, %294 : vector<8x32xf32>
    %296 = vector.extract_strided_slice %264 {offsets = [0, 0], sizes = [8, 32], strides = [1, 1]} : vector<8x128xf32> to vector<8x32xf32>
    %cst_118 = arith.constant 5.000000e-01 : f32
    %297 = vector.broadcast %cst_118 : f32 to vector<8x32xf32>
    %298 = arith.mulf %297, %296 : vector<8x32xf32>
    %299 = math.tanh %298 : vector<8x32xf32>
    %cst_119 = arith.constant 1.000000e+00 : f32
    %300 = vector.broadcast %cst_119 : f32 to vector<8x32xf32>
    %301 = arith.addf %299, %300 : vector<8x32xf32>
    %cst_120 = arith.constant 5.000000e-01 : f32
    %302 = vector.broadcast %cst_120 : f32 to vector<8x32xf32>
    %303 = arith.mulf %302, %301 : vector<8x32xf32>
    %304 = vector.extract_strided_slice %264 {offsets = [0, 32], sizes = [8, 32], strides = [1, 1]} : vector<8x128xf32> to vector<8x32xf32>
    %cst_121 = arith.constant 5.000000e-01 : f32
    %305 = vector.broadcast %cst_121 : f32 to vector<8x32xf32>
    %306 = arith.mulf %305, %304 : vector<8x32xf32>
    %307 = math.tanh %306 : vector<8x32xf32>
    %cst_122 = arith.constant 1.000000e+00 : f32
    %308 = vector.broadcast %cst_122 : f32 to vector<8x32xf32>
    %309 = arith.addf %307, %308 : vector<8x32xf32>
    %cst_123 = arith.constant 5.000000e-01 : f32
    %310 = vector.broadcast %cst_123 : f32 to vector<8x32xf32>
    %311 = arith.mulf %310, %309 : vector<8x32xf32>
    %312 = vector.extract_strided_slice %264 {offsets = [0, 64], sizes = [8, 32], strides = [1, 1]} : vector<8x128xf32> to vector<8x32xf32>
    %313 = math.tanh %312 : vector<8x32xf32>
    %314 = vector.extract_strided_slice %264 {offsets = [0, 96], sizes = [8, 32], strides = [1, 1]} : vector<8x128xf32> to vector<8x32xf32>
    %cst_124 = arith.constant 5.000000e-01 : f32
    %315 = vector.broadcast %cst_124 : f32 to vector<8x32xf32>
    %316 = arith.mulf %315, %314 : vector<8x32xf32>
    %317 = math.tanh %316 : vector<8x32xf32>
    %cst_125 = arith.constant 1.000000e+00 : f32
    %318 = vector.broadcast %cst_125 : f32 to vector<8x32xf32>
    %319 = arith.addf %317, %318 : vector<8x32xf32>
    %cst_126 = arith.constant 5.000000e-01 : f32
    %320 = vector.broadcast %cst_126 : f32 to vector<8x32xf32>
    %321 = arith.mulf %320, %319 : vector<8x32xf32>
    %322 = arith.mulf %311, %242 : vector<8x32xf32>
    %323 = arith.mulf %303, %313 : vector<8x32xf32>
    %324 = arith.addf %322, %323 : vector<8x32xf32>
    %325 = math.tanh %324 : vector<8x32xf32>
    %326 = arith.mulf %321, %325 : vector<8x32xf32>
    %327 = arith.truncf %295 : vector<8x32xf32> to vector<8x32xbf16>
    %328 = arith.truncf %326 : vector<8x32xf32> to vector<8x32xbf16>
    %329 = arith.truncf %295 : vector<8x32xf32> to vector<8x32xbf16>
    %c3_127 = arith.constant 3 : index
    %c0_128 = arith.constant 0 : index
    %c0_129 = arith.constant 0 : index
    %330 = vector.load %arg5[%c3_127, %c0_128, %c0_129] : memref<8x8x32xbf16, #tpu.memory_space<vmem>>, vector<1x8x32xbf16>
    %331 = vector.shape_cast %330 : vector<1x8x32xbf16> to vector<8x32xbf16>
    %332 = vector.shape_cast %329 : vector<8x32xbf16> to vector<1x8x32xbf16>
    tpu.vector_store %arg5[%c3_127, %c0_128, %c0_129], %332 {strides = array<i32>} : memref<8x8x32xbf16, #tpu.memory_space<vmem>>, vector<1x8x32xbf16>,
    %333 = arith.truncf %326 : vector<8x32xf32> to vector<8x32xbf16>
    %c4 = arith.constant 4 : index
    %c0_130 = arith.constant 0 : index
    %c0_131 = arith.constant 0 : index
    %334 = vector.load %arg6[%c4, %c0_130, %c0_131] : memref<8x8x32xbf16, #tpu.memory_space<vmem>>, vector<1x8x32xbf16>
    %335 = vector.shape_cast %334 : vector<1x8x32xbf16> to vector<8x32xbf16>
    %336 = vector.shape_cast %333 : vector<8x32xbf16> to vector<1x8x32xbf16>
    tpu.vector_store %arg6[%c4, %c0_130, %c0_131], %336 {strides = array<i32>} : memref<8x8x32xbf16, #tpu.memory_space<vmem>>, vector<1x8x32xbf16>,
    %c4_132 = arith.constant 4 : index
    %c0_133 = arith.constant 0 : index
    %c0_134 = arith.constant 0 : index
    %337 = vector.load %arg1[%c4_132, %c0_133, %c0_134] : memref<8x8x128xbf16, #tpu.memory_space<vmem>>, vector<1x8x128xbf16>
    %338 = vector.shape_cast %337 : vector<1x8x128xbf16> to vector<8x128xbf16>
    %339 = arith.extf %338 : vector<8x128xbf16> to vector<8x128xf32>
    %cst_135 = arith.constant dense<0.000000e+00> : vector<8x128xf32>
    %340 = tpu.matmul %327, %3, %cst_135 {dimension_numbers = #tpu.dot_dimension_numbers<[1], [0], [0], [1], [0, 0, 1, 1], [], []>} : vector<8x32xbf16>, vector<32x128xbf16>, vector<8x128xf32> -> vector<8x128xf32>
    %341 = arith.addf %339, %340 : vector<8x128xf32>
    %c4_136 = arith.constant 4 : index
    %c0_137 = arith.constant 0 : index
    %c0_138 = arith.constant 0 : index
    %342 = vector.load %arg2[%c4_136, %c0_137, %c0_138] : memref<8x8x128xbf16, #tpu.memory_space<vmem>>, vector<1x8x128xbf16>
    %343 = vector.shape_cast %342 : vector<1x8x128xbf16> to vector<8x128xbf16>
    %344 = arith.extf %343 : vector<8x128xbf16> to vector<8x128xf32>
    %cst_139 = arith.constant dense<0.000000e+00> : vector<8x128xf32>
    %345 = tpu.matmul %328, %4, %cst_139 {dimension_numbers = #tpu.dot_dimension_numbers<[1], [0], [0], [1], [0, 0, 1, 1], [], []>} : vector<8x32xbf16>, vector<32x128xbf16>, vector<8x128xf32> -> vector<8x128xf32>
    %346 = arith.addf %344, %345 : vector<8x128xf32>
    %347 = vector.extract_strided_slice %341 {offsets = [0, 0], sizes = [8, 32], strides = [1, 1]} : vector<8x128xf32> to vector<8x32xf32>
    %cst_140 = arith.constant 5.000000e-01 : f32
    %348 = vector.broadcast %cst_140 : f32 to vector<8x32xf32>
    %349 = arith.mulf %348, %347 : vector<8x32xf32>
    %350 = math.tanh %349 : vector<8x32xf32>
    %cst_141 = arith.constant 1.000000e+00 : f32
    %351 = vector.broadcast %cst_141 : f32 to vector<8x32xf32>
    %352 = arith.addf %350, %351 : vector<8x32xf32>
    %cst_142 = arith.constant 5.000000e-01 : f32
    %353 = vector.broadcast %cst_142 : f32 to vector<8x32xf32>
    %354 = arith.mulf %353, %352 : vector<8x32xf32>
    %355 = vector.extract_strided_slice %341 {offsets = [0, 32], sizes = [8, 32], strides = [1, 1]} : vector<8x128xf32> to vector<8x32xf32>
    %cst_143 = arith.constant 5.000000e-01 : f32
    %356 = vector.broadcast %cst_143 : f32 to vector<8x32xf32>
    %357 = arith.mulf %356, %355 : vector<8x32xf32>
    %358 = math.tanh %357 : vector<8x32xf32>
    %cst_144 = arith.constant 1.000000e+00 : f32
    %359 = vector.broadcast %cst_144 : f32 to vector<8x32xf32>
    %360 = arith.addf %358, %359 : vector<8x32xf32>
    %cst_145 = arith.constant 5.000000e-01 : f32
    %361 = vector.broadcast %cst_145 : f32 to vector<8x32xf32>
    %362 = arith.mulf %361, %360 : vector<8x32xf32>
    %363 = vector.extract_strided_slice %341 {offsets = [0, 64], sizes = [8, 32], strides = [1, 1]} : vector<8x128xf32> to vector<8x32xf32>
    %364 = math.tanh %363 : vector<8x32xf32>
    %365 = vector.extract_strided_slice %341 {offsets = [0, 96], sizes = [8, 32], strides = [1, 1]} : vector<8x128xf32> to vector<8x32xf32>
    %cst_146 = arith.constant 5.000000e-01 : f32
    %366 = vector.broadcast %cst_146 : f32 to vector<8x32xf32>
    %367 = arith.mulf %366, %365 : vector<8x32xf32>
    %368 = math.tanh %367 : vector<8x32xf32>
    %cst_147 = arith.constant 1.000000e+00 : f32
    %369 = vector.broadcast %cst_147 : f32 to vector<8x32xf32>
    %370 = arith.addf %368, %369 : vector<8x32xf32>
    %cst_148 = arith.constant 5.000000e-01 : f32
    %371 = vector.broadcast %cst_148 : f32 to vector<8x32xf32>
    %372 = arith.mulf %371, %370 : vector<8x32xf32>
    %373 = arith.mulf %362, %293 : vector<8x32xf32>
    %374 = arith.mulf %354, %364 : vector<8x32xf32>
    %375 = arith.addf %373, %374 : vector<8x32xf32>
    %376 = math.tanh %375 : vector<8x32xf32>
    %377 = arith.mulf %372, %376 : vector<8x32xf32>
    %378 = vector.extract_strided_slice %346 {offsets = [0, 0], sizes = [8, 32], strides = [1, 1]} : vector<8x128xf32> to vector<8x32xf32>
    %cst_149 = arith.constant 5.000000e-01 : f32
    %379 = vector.broadcast %cst_149 : f32 to vector<8x32xf32>
    %380 = arith.mulf %379, %378 : vector<8x32xf32>
    %381 = math.tanh %380 : vector<8x32xf32>
    %cst_150 = arith.constant 1.000000e+00 : f32
    %382 = vector.broadcast %cst_150 : f32 to vector<8x32xf32>
    %383 = arith.addf %381, %382 : vector<8x32xf32>
    %cst_151 = arith.constant 5.000000e-01 : f32
    %384 = vector.broadcast %cst_151 : f32 to vector<8x32xf32>
    %385 = arith.mulf %384, %383 : vector<8x32xf32>
    %386 = vector.extract_strided_slice %346 {offsets = [0, 32], sizes = [8, 32], strides = [1, 1]} : vector<8x128xf32> to vector<8x32xf32>
    %cst_152 = arith.constant 5.000000e-01 : f32
    %387 = vector.broadcast %cst_152 : f32 to vector<8x32xf32>
    %388 = arith.mulf %387, %386 : vector<8x32xf32>
    %389 = math.tanh %388 : vector<8x32xf32>
    %cst_153 = arith.constant 1.000000e+00 : f32
    %390 = vector.broadcast %cst_153 : f32 to vector<8x32xf32>
    %391 = arith.addf %389, %390 : vector<8x32xf32>
    %cst_154 = arith.constant 5.000000e-01 : f32
    %392 = vector.broadcast %cst_154 : f32 to vector<8x32xf32>
    %393 = arith.mulf %392, %391 : vector<8x32xf32>
    %394 = vector.extract_strided_slice %346 {offsets = [0, 64], sizes = [8, 32], strides = [1, 1]} : vector<8x128xf32> to vector<8x32xf32>
    %395 = math.tanh %394 : vector<8x32xf32>
    %396 = vector.extract_strided_slice %346 {offsets = [0, 96], sizes = [8, 32], strides = [1, 1]} : vector<8x128xf32> to vector<8x32xf32>
    %cst_155 = arith.constant 5.000000e-01 : f32
    %397 = vector.broadcast %cst_155 : f32 to vector<8x32xf32>
    %398 = arith.mulf %397, %396 : vector<8x32xf32>
    %399 = math.tanh %398 : vector<8x32xf32>
    %cst_156 = arith.constant 1.000000e+00 : f32
    %400 = vector.broadcast %cst_156 : f32 to vector<8x32xf32>
    %401 = arith.addf %399, %400 : vector<8x32xf32>
    %cst_157 = arith.constant 5.000000e-01 : f32
    %402 = vector.broadcast %cst_157 : f32 to vector<8x32xf32>
    %403 = arith.mulf %402, %401 : vector<8x32xf32>
    %404 = arith.mulf %393, %324 : vector<8x32xf32>
    %405 = arith.mulf %385, %395 : vector<8x32xf32>
    %406 = arith.addf %404, %405 : vector<8x32xf32>
    %407 = math.tanh %406 : vector<8x32xf32>
    %408 = arith.mulf %403, %407 : vector<8x32xf32>
    %409 = arith.truncf %377 : vector<8x32xf32> to vector<8x32xbf16>
    %410 = arith.truncf %408 : vector<8x32xf32> to vector<8x32xbf16>
    %411 = arith.truncf %377 : vector<8x32xf32> to vector<8x32xbf16>
    %c4_158 = arith.constant 4 : index
    %c0_159 = arith.constant 0 : index
    %c0_160 = arith.constant 0 : index
    %412 = vector.load %arg5[%c4_158, %c0_159, %c0_160] : memref<8x8x32xbf16, #tpu.memory_space<vmem>>, vector<1x8x32xbf16>
    %413 = vector.shape_cast %412 : vector<1x8x32xbf16> to vector<8x32xbf16>
    %414 = vector.shape_cast %411 : vector<8x32xbf16> to vector<1x8x32xbf16>
    tpu.vector_store %arg5[%c4_158, %c0_159, %c0_160], %414 {strides = array<i32>} : memref<8x8x32xbf16, #tpu.memory_space<vmem>>, vector<1x8x32xbf16>,
    %415 = arith.truncf %408 : vector<8x32xf32> to vector<8x32xbf16>
    %c3_161 = arith.constant 3 : index
    %c0_162 = arith.constant 0 : index
    %c0_163 = arith.constant 0 : index
    %416 = vector.load %arg6[%c3_161, %c0_162, %c0_163] : memref<8x8x32xbf16, #tpu.memory_space<vmem>>, vector<1x8x32xbf16>
    %417 = vector.shape_cast %416 : vector<1x8x32xbf16> to vector<8x32xbf16>
    %418 = vector.shape_cast %415 : vector<8x32xbf16> to vector<1x8x32xbf16>
    tpu.vector_store %arg6[%c3_161, %c0_162, %c0_163], %418 {strides = array<i32>} : memref<8x8x32xbf16, #tpu.memory_space<vmem>>, vector<1x8x32xbf16>,
    %c5_164 = arith.constant 5 : index
    %c0_165 = arith.constant 0 : index
    %c0_166 = arith.constant 0 : index
    %419 = vector.load %arg1[%c5_164, %c0_165, %c0_166] : memref<8x8x128xbf16, #tpu.memory_space<vmem>>, vector<1x8x128xbf16>
    %420 = vector.shape_cast %419 : vector<1x8x128xbf16> to vector<8x128xbf16>
    %421 = arith.extf %420 : vector<8x128xbf16> to vector<8x128xf32>
    %cst_167 = arith.constant dense<0.000000e+00> : vector<8x128xf32>
    %422 = tpu.matmul %409, %3, %cst_167 {dimension_numbers = #tpu.dot_dimension_numbers<[1], [0], [0], [1], [0, 0, 1, 1], [], []>} : vector<8x32xbf16>, vector<32x128xbf16>, vector<8x128xf32> -> vector<8x128xf32>
    %423 = arith.addf %421, %422 : vector<8x128xf32>
    %c5_168 = arith.constant 5 : index
    %c0_169 = arith.constant 0 : index
    %c0_170 = arith.constant 0 : index
    %424 = vector.load %arg2[%c5_168, %c0_169, %c0_170] : memref<8x8x128xbf16, #tpu.memory_space<vmem>>, vector<1x8x128xbf16>
    %425 = vector.shape_cast %424 : vector<1x8x128xbf16> to vector<8x128xbf16>
    %426 = arith.extf %425 : vector<8x128xbf16> to vector<8x128xf32>
    %cst_171 = arith.constant dense<0.000000e+00> : vector<8x128xf32>
    %427 = tpu.matmul %410, %4, %cst_171 {dimension_numbers = #tpu.dot_dimension_numbers<[1], [0], [0], [1], [0, 0, 1, 1], [], []>} : vector<8x32xbf16>, vector<32x128xbf16>, vector<8x128xf32> -> vector<8x128xf32>
    %428 = arith.addf %426, %427 : vector<8x128xf32>
    %429 = vector.extract_strided_slice %423 {offsets = [0, 0], sizes = [8, 32], strides = [1, 1]} : vector<8x128xf32> to vector<8x32xf32>
    %cst_172 = arith.constant 5.000000e-01 : f32
    %430 = vector.broadcast %cst_172 : f32 to vector<8x32xf32>
    %431 = arith.mulf %430, %429 : vector<8x32xf32>
    %432 = math.tanh %431 : vector<8x32xf32>
    %cst_173 = arith.constant 1.000000e+00 : f32
    %433 = vector.broadcast %cst_173 : f32 to vector<8x32xf32>
    %434 = arith.addf %432, %433 : vector<8x32xf32>
    %cst_174 = arith.constant 5.000000e-01 : f32
    %435 = vector.broadcast %cst_174 : f32 to vector<8x32xf32>
    %436 = arith.mulf %435, %434 : vector<8x32xf32>
    %437 = vector.extract_strided_slice %423 {offsets = [0, 32], sizes = [8, 32], strides = [1, 1]} : vector<8x128xf32> to vector<8x32xf32>
    %cst_175 = arith.constant 5.000000e-01 : f32
    %438 = vector.broadcast %cst_175 : f32 to vector<8x32xf32>
    %439 = arith.mulf %438, %437 : vector<8x32xf32>
    %440 = math.tanh %439 : vector<8x32xf32>
    %cst_176 = arith.constant 1.000000e+00 : f32
    %441 = vector.broadcast %cst_176 : f32 to vector<8x32xf32>
    %442 = arith.addf %440, %441 : vector<8x32xf32>
    %cst_177 = arith.constant 5.000000e-01 : f32
    %443 = vector.broadcast %cst_177 : f32 to vector<8x32xf32>
    %444 = arith.mulf %443, %442 : vector<8x32xf32>
    %445 = vector.extract_strided_slice %423 {offsets = [0, 64], sizes = [8, 32], strides = [1, 1]} : vector<8x128xf32> to vector<8x32xf32>
    %446 = math.tanh %445 : vector<8x32xf32>
    %447 = vector.extract_strided_slice %423 {offsets = [0, 96], sizes = [8, 32], strides = [1, 1]} : vector<8x128xf32> to vector<8x32xf32>
    %cst_178 = arith.constant 5.000000e-01 : f32
    %448 = vector.broadcast %cst_178 : f32 to vector<8x32xf32>
    %449 = arith.mulf %448, %447 : vector<8x32xf32>
    %450 = math.tanh %449 : vector<8x32xf32>
    %cst_179 = arith.constant 1.000000e+00 : f32
    %451 = vector.broadcast %cst_179 : f32 to vector<8x32xf32>
    %452 = arith.addf %450, %451 : vector<8x32xf32>
    %cst_180 = arith.constant 5.000000e-01 : f32
    %453 = vector.broadcast %cst_180 : f32 to vector<8x32xf32>
    %454 = arith.mulf %453, %452 : vector<8x32xf32>
    %455 = arith.mulf %444, %375 : vector<8x32xf32>
    %456 = arith.mulf %436, %446 : vector<8x32xf32>
    %457 = arith.addf %455, %456 : vector<8x32xf32>
    %458 = math.tanh %457 : vector<8x32xf32>
    %459 = arith.mulf %454, %458 : vector<8x32xf32>
    %460 = vector.extract_strided_slice %428 {offsets = [0, 0], sizes = [8, 32], strides = [1, 1]} : vector<8x128xf32> to vector<8x32xf32>
    %cst_181 = arith.constant 5.000000e-01 : f32
    %461 = vector.broadcast %cst_181 : f32 to vector<8x32xf32>
    %462 = arith.mulf %461, %460 : vector<8x32xf32>
    %463 = math.tanh %462 : vector<8x32xf32>
    %cst_182 = arith.constant 1.000000e+00 : f32
    %464 = vector.broadcast %cst_182 : f32 to vector<8x32xf32>
    %465 = arith.addf %463, %464 : vector<8x32xf32>
    %cst_183 = arith.constant 5.000000e-01 : f32
    %466 = vector.broadcast %cst_183 : f32 to vector<8x32xf32>
    %467 = arith.mulf %466, %465 : vector<8x32xf32>
    %468 = vector.extract_strided_slice %428 {offsets = [0, 32], sizes = [8, 32], strides = [1, 1]} : vector<8x128xf32> to vector<8x32xf32>
    %cst_184 = arith.constant 5.000000e-01 : f32
    %469 = vector.broadcast %cst_184 : f32 to vector<8x32xf32>
    %470 = arith.mulf %469, %468 : vector<8x32xf32>
    %471 = math.tanh %470 : vector<8x32xf32>
    %cst_185 = arith.constant 1.000000e+00 : f32
    %472 = vector.broadcast %cst_185 : f32 to vector<8x32xf32>
    %473 = arith.addf %471, %472 : vector<8x32xf32>
    %cst_186 = arith.constant 5.000000e-01 : f32
    %474 = vector.broadcast %cst_186 : f32 to vector<8x32xf32>
    %475 = arith.mulf %474, %473 : vector<8x32xf32>
    %476 = vector.extract_strided_slice %428 {offsets = [0, 64], sizes = [8, 32], strides = [1, 1]} : vector<8x128xf32> to vector<8x32xf32>
    %477 = math.tanh %476 : vector<8x32xf32>
    %478 = vector.extract_strided_slice %428 {offsets = [0, 96], sizes = [8, 32], strides = [1, 1]} : vector<8x128xf32> to vector<8x32xf32>
    %cst_187 = arith.constant 5.000000e-01 : f32
    %479 = vector.broadcast %cst_187 : f32 to vector<8x32xf32>
    %480 = arith.mulf %479, %478 : vector<8x32xf32>
    %481 = math.tanh %480 : vector<8x32xf32>
    %cst_188 = arith.constant 1.000000e+00 : f32
    %482 = vector.broadcast %cst_188 : f32 to vector<8x32xf32>
    %483 = arith.addf %481, %482 : vector<8x32xf32>
    %cst_189 = arith.constant 5.000000e-01 : f32
    %484 = vector.broadcast %cst_189 : f32 to vector<8x32xf32>
    %485 = arith.mulf %484, %483 : vector<8x32xf32>
    %486 = arith.mulf %475, %406 : vector<8x32xf32>
    %487 = arith.mulf %467, %477 : vector<8x32xf32>
    %488 = arith.addf %486, %487 : vector<8x32xf32>
    %489 = math.tanh %488 : vector<8x32xf32>
    %490 = arith.mulf %485, %489 : vector<8x32xf32>
    %491 = arith.truncf %459 : vector<8x32xf32> to vector<8x32xbf16>
    %492 = arith.truncf %490 : vector<8x32xf32> to vector<8x32xbf16>
    %493 = arith.truncf %459 : vector<8x32xf32> to vector<8x32xbf16>
    %c5_190 = arith.constant 5 : index
    %c0_191 = arith.constant 0 : index
    %c0_192 = arith.constant 0 : index
    %494 = vector.load %arg5[%c5_190, %c0_191, %c0_192] : memref<8x8x32xbf16, #tpu.memory_space<vmem>>, vector<1x8x32xbf16>
    %495 = vector.shape_cast %494 : vector<1x8x32xbf16> to vector<8x32xbf16>
    %496 = vector.shape_cast %493 : vector<8x32xbf16> to vector<1x8x32xbf16>
    tpu.vector_store %arg5[%c5_190, %c0_191, %c0_192], %496 {strides = array<i32>} : memref<8x8x32xbf16, #tpu.memory_space<vmem>>, vector<1x8x32xbf16>,
    %497 = arith.truncf %490 : vector<8x32xf32> to vector<8x32xbf16>
    %c2_193 = arith.constant 2 : index
    %c0_194 = arith.constant 0 : index
    %c0_195 = arith.constant 0 : index
    %498 = vector.load %arg6[%c2_193, %c0_194, %c0_195] : memref<8x8x32xbf16, #tpu.memory_space<vmem>>, vector<1x8x32xbf16>
    %499 = vector.shape_cast %498 : vector<1x8x32xbf16> to vector<8x32xbf16>
    %500 = vector.shape_cast %497 : vector<8x32xbf16> to vector<1x8x32xbf16>
    tpu.vector_store %arg6[%c2_193, %c0_194, %c0_195], %500 {strides = array<i32>} : memref<8x8x32xbf16, #tpu.memory_space<vmem>>, vector<1x8x32xbf16>,
    %c6_196 = arith.constant 6 : index
    %c0_197 = arith.constant 0 : index
    %c0_198 = arith.constant 0 : index
    %501 = vector.load %arg1[%c6_196, %c0_197, %c0_198] : memref<8x8x128xbf16, #tpu.memory_space<vmem>>, vector<1x8x128xbf16>
    %502 = vector.shape_cast %501 : vector<1x8x128xbf16> to vector<8x128xbf16>
    %503 = arith.extf %502 : vector<8x128xbf16> to vector<8x128xf32>
    %cst_199 = arith.constant dense<0.000000e+00> : vector<8x128xf32>
    %504 = tpu.matmul %491, %3, %cst_199 {dimension_numbers = #tpu.dot_dimension_numbers<[1], [0], [0], [1], [0, 0, 1, 1], [], []>} : vector<8x32xbf16>, vector<32x128xbf16>, vector<8x128xf32> -> vector<8x128xf32>
    %505 = arith.addf %503, %504 : vector<8x128xf32>
    %c6_200 = arith.constant 6 : index
    %c0_201 = arith.constant 0 : index
    %c0_202 = arith.constant 0 : index
    %506 = vector.load %arg2[%c6_200, %c0_201, %c0_202] : memref<8x8x128xbf16, #tpu.memory_space<vmem>>, vector<1x8x128xbf16>
    %507 = vector.shape_cast %506 : vector<1x8x128xbf16> to vector<8x128xbf16>
    %508 = arith.extf %507 : vector<8x128xbf16> to vector<8x128xf32>
    %cst_203 = arith.constant dense<0.000000e+00> : vector<8x128xf32>
    %509 = tpu.matmul %492, %4, %cst_203 {dimension_numbers = #tpu.dot_dimension_numbers<[1], [0], [0], [1], [0, 0, 1, 1], [], []>} : vector<8x32xbf16>, vector<32x128xbf16>, vector<8x128xf32> -> vector<8x128xf32>
    %510 = arith.addf %508, %509 : vector<8x128xf32>
    %511 = vector.extract_strided_slice %505 {offsets = [0, 0], sizes = [8, 32], strides = [1, 1]} : vector<8x128xf32> to vector<8x32xf32>
    %cst_204 = arith.constant 5.000000e-01 : f32
    %512 = vector.broadcast %cst_204 : f32 to vector<8x32xf32>
    %513 = arith.mulf %512, %511 : vector<8x32xf32>
    %514 = math.tanh %513 : vector<8x32xf32>
    %cst_205 = arith.constant 1.000000e+00 : f32
    %515 = vector.broadcast %cst_205 : f32 to vector<8x32xf32>
    %516 = arith.addf %514, %515 : vector<8x32xf32>
    %cst_206 = arith.constant 5.000000e-01 : f32
    %517 = vector.broadcast %cst_206 : f32 to vector<8x32xf32>
    %518 = arith.mulf %517, %516 : vector<8x32xf32>
    %519 = vector.extract_strided_slice %505 {offsets = [0, 32], sizes = [8, 32], strides = [1, 1]} : vector<8x128xf32> to vector<8x32xf32>
    %cst_207 = arith.constant 5.000000e-01 : f32
    %520 = vector.broadcast %cst_207 : f32 to vector<8x32xf32>
    %521 = arith.mulf %520, %519 : vector<8x32xf32>
    %522 = math.tanh %521 : vector<8x32xf32>
    %cst_208 = arith.constant 1.000000e+00 : f32
    %523 = vector.broadcast %cst_208 : f32 to vector<8x32xf32>
    %524 = arith.addf %522, %523 : vector<8x32xf32>
    %cst_209 = arith.constant 5.000000e-01 : f32
    %525 = vector.broadcast %cst_209 : f32 to vector<8x32xf32>
    %526 = arith.mulf %525, %524 : vector<8x32xf32>
    %527 = vector.extract_strided_slice %505 {offsets = [0, 64], sizes = [8, 32], strides = [1, 1]} : vector<8x128xf32> to vector<8x32xf32>
    %528 = math.tanh %527 : vector<8x32xf32>
    %529 = vector.extract_strided_slice %505 {offsets = [0, 96], sizes = [8, 32], strides = [1, 1]} : vector<8x128xf32> to vector<8x32xf32>
    %cst_210 = arith.constant 5.000000e-01 : f32
    %530 = vector.broadcast %cst_210 : f32 to vector<8x32xf32>
    %531 = arith.mulf %530, %529 : vector<8x32xf32>
    %532 = math.tanh %531 : vector<8x32xf32>
    %cst_211 = arith.constant 1.000000e+00 : f32
    %533 = vector.broadcast %cst_211 : f32 to vector<8x32xf32>
    %534 = arith.addf %532, %533 : vector<8x32xf32>
    %cst_212 = arith.constant 5.000000e-01 : f32
    %535 = vector.broadcast %cst_212 : f32 to vector<8x32xf32>
    %536 = arith.mulf %535, %534 : vector<8x32xf32>
    %537 = arith.mulf %526, %457 : vector<8x32xf32>
    %538 = arith.mulf %518, %528 : vector<8x32xf32>
    %539 = arith.addf %537, %538 : vector<8x32xf32>
    %540 = math.tanh %539 : vector<8x32xf32>
    %541 = arith.mulf %536, %540 : vector<8x32xf32>
    %542 = vector.extract_strided_slice %510 {offsets = [0, 0], sizes = [8, 32], strides = [1, 1]} : vector<8x128xf32> to vector<8x32xf32>
    %cst_213 = arith.constant 5.000000e-01 : f32
    %543 = vector.broadcast %cst_213 : f32 to vector<8x32xf32>
    %544 = arith.mulf %543, %542 : vector<8x32xf32>
    %545 = math.tanh %544 : vector<8x32xf32>
    %cst_214 = arith.constant 1.000000e+00 : f32
    %546 = vector.broadcast %cst_214 : f32 to vector<8x32xf32>
    %547 = arith.addf %545, %546 : vector<8x32xf32>
    %cst_215 = arith.constant 5.000000e-01 : f32
    %548 = vector.broadcast %cst_215 : f32 to vector<8x32xf32>
    %549 = arith.mulf %548, %547 : vector<8x32xf32>
    %550 = vector.extract_strided_slice %510 {offsets = [0, 32], sizes = [8, 32], strides = [1, 1]} : vector<8x128xf32> to vector<8x32xf32>
    %cst_216 = arith.constant 5.000000e-01 : f32
    %551 = vector.broadcast %cst_216 : f32 to vector<8x32xf32>
    %552 = arith.mulf %551, %550 : vector<8x32xf32>
    %553 = math.tanh %552 : vector<8x32xf32>
    %cst_217 = arith.constant 1.000000e+00 : f32
    %554 = vector.broadcast %cst_217 : f32 to vector<8x32xf32>
    %555 = arith.addf %553, %554 : vector<8x32xf32>
    %cst_218 = arith.constant 5.000000e-01 : f32
    %556 = vector.broadcast %cst_218 : f32 to vector<8x32xf32>
    %557 = arith.mulf %556, %555 : vector<8x32xf32>
    %558 = vector.extract_strided_slice %510 {offsets = [0, 64], sizes = [8, 32], strides = [1, 1]} : vector<8x128xf32> to vector<8x32xf32>
    %559 = math.tanh %558 : vector<8x32xf32>
    %560 = vector.extract_strided_slice %510 {offsets = [0, 96], sizes = [8, 32], strides = [1, 1]} : vector<8x128xf32> to vector<8x32xf32>
    %cst_219 = arith.constant 5.000000e-01 : f32
    %561 = vector.broadcast %cst_219 : f32 to vector<8x32xf32>
    %562 = arith.mulf %561, %560 : vector<8x32xf32>
    %563 = math.tanh %562 : vector<8x32xf32>
    %cst_220 = arith.constant 1.000000e+00 : f32
    %564 = vector.broadcast %cst_220 : f32 to vector<8x32xf32>
    %565 = arith.addf %563, %564 : vector<8x32xf32>
    %cst_221 = arith.constant 5.000000e-01 : f32
    %566 = vector.broadcast %cst_221 : f32 to vector<8x32xf32>
    %567 = arith.mulf %566, %565 : vector<8x32xf32>
    %568 = arith.mulf %557, %488 : vector<8x32xf32>
    %569 = arith.mulf %549, %559 : vector<8x32xf32>
    %570 = arith.addf %568, %569 : vector<8x32xf32>
    %571 = math.tanh %570 : vector<8x32xf32>
    %572 = arith.mulf %567, %571 : vector<8x32xf32>
    %573 = arith.truncf %541 : vector<8x32xf32> to vector<8x32xbf16>
    %574 = arith.truncf %572 : vector<8x32xf32> to vector<8x32xbf16>
    %575 = arith.truncf %541 : vector<8x32xf32> to vector<8x32xbf16>
    %c6_222 = arith.constant 6 : index
    %c0_223 = arith.constant 0 : index
    %c0_224 = arith.constant 0 : index
    %576 = vector.load %arg5[%c6_222, %c0_223, %c0_224] : memref<8x8x32xbf16, #tpu.memory_space<vmem>>, vector<1x8x32xbf16>
    %577 = vector.shape_cast %576 : vector<1x8x32xbf16> to vector<8x32xbf16>
    %578 = vector.shape_cast %575 : vector<8x32xbf16> to vector<1x8x32xbf16>
    tpu.vector_store %arg5[%c6_222, %c0_223, %c0_224], %578 {strides = array<i32>} : memref<8x8x32xbf16, #tpu.memory_space<vmem>>, vector<1x8x32xbf16>,
    %579 = arith.truncf %572 : vector<8x32xf32> to vector<8x32xbf16>
    %c1_225 = arith.constant 1 : index
    %c0_226 = arith.constant 0 : index
    %c0_227 = arith.constant 0 : index
    %580 = vector.load %arg6[%c1_225, %c0_226, %c0_227] : memref<8x8x32xbf16, #tpu.memory_space<vmem>>, vector<1x8x32xbf16>
    %581 = vector.shape_cast %580 : vector<1x8x32xbf16> to vector<8x32xbf16>
    %582 = vector.shape_cast %579 : vector<8x32xbf16> to vector<1x8x32xbf16>
    tpu.vector_store %arg6[%c1_225, %c0_226, %c0_227], %582 {strides = array<i32>} : memref<8x8x32xbf16, #tpu.memory_space<vmem>>, vector<1x8x32xbf16>,
    %c7_228 = arith.constant 7 : index
    %c0_229 = arith.constant 0 : index
    %c0_230 = arith.constant 0 : index
    %583 = vector.load %arg1[%c7_228, %c0_229, %c0_230] : memref<8x8x128xbf16, #tpu.memory_space<vmem>>, vector<1x8x128xbf16>
    %584 = vector.shape_cast %583 : vector<1x8x128xbf16> to vector<8x128xbf16>
    %585 = arith.extf %584 : vector<8x128xbf16> to vector<8x128xf32>
    %cst_231 = arith.constant dense<0.000000e+00> : vector<8x128xf32>
    %586 = tpu.matmul %573, %3, %cst_231 {dimension_numbers = #tpu.dot_dimension_numbers<[1], [0], [0], [1], [0, 0, 1, 1], [], []>} : vector<8x32xbf16>, vector<32x128xbf16>, vector<8x128xf32> -> vector<8x128xf32>
    %587 = arith.addf %585, %586 : vector<8x128xf32>
    %c7_232 = arith.constant 7 : index
    %c0_233 = arith.constant 0 : index
    %c0_234 = arith.constant 0 : index
    %588 = vector.load %arg2[%c7_232, %c0_233, %c0_234] : memref<8x8x128xbf16, #tpu.memory_space<vmem>>, vector<1x8x128xbf16>
    %589 = vector.shape_cast %588 : vector<1x8x128xbf16> to vector<8x128xbf16>
    %590 = arith.extf %589 : vector<8x128xbf16> to vector<8x128xf32>
    %cst_235 = arith.constant dense<0.000000e+00> : vector<8x128xf32>
    %591 = tpu.matmul %574, %4, %cst_235 {dimension_numbers = #tpu.dot_dimension_numbers<[1], [0], [0], [1], [0, 0, 1, 1], [], []>} : vector<8x32xbf16>, vector<32x128xbf16>, vector<8x128xf32> -> vector<8x128xf32>
    %592 = arith.addf %590, %591 : vector<8x128xf32>
    %593 = vector.extract_strided_slice %587 {offsets = [0, 0], sizes = [8, 32], strides = [1, 1]} : vector<8x128xf32> to vector<8x32xf32>
    %cst_236 = arith.constant 5.000000e-01 : f32
    %594 = vector.broadcast %cst_236 : f32 to vector<8x32xf32>
    %595 = arith.mulf %594, %593 : vector<8x32xf32>
    %596 = math.tanh %595 : vector<8x32xf32>
    %cst_237 = arith.constant 1.000000e+00 : f32
    %597 = vector.broadcast %cst_237 : f32 to vector<8x32xf32>
    %598 = arith.addf %596, %597 : vector<8x32xf32>
    %cst_238 = arith.constant 5.000000e-01 : f32
    %599 = vector.broadcast %cst_238 : f32 to vector<8x32xf32>
    %600 = arith.mulf %599, %598 : vector<8x32xf32>
    %601 = vector.extract_strided_slice %587 {offsets = [0, 32], sizes = [8, 32], strides = [1, 1]} : vector<8x128xf32> to vector<8x32xf32>
    %cst_239 = arith.constant 5.000000e-01 : f32
    %602 = vector.broadcast %cst_239 : f32 to vector<8x32xf32>
    %603 = arith.mulf %602, %601 : vector<8x32xf32>
    %604 = math.tanh %603 : vector<8x32xf32>
    %cst_240 = arith.constant 1.000000e+00 : f32
    %605 = vector.broadcast %cst_240 : f32 to vector<8x32xf32>
    %606 = arith.addf %604, %605 : vector<8x32xf32>
    %cst_241 = arith.constant 5.000000e-01 : f32
    %607 = vector.broadcast %cst_241 : f32 to vector<8x32xf32>
    %608 = arith.mulf %607, %606 : vector<8x32xf32>
    %609 = vector.extract_strided_slice %587 {offsets = [0, 64], sizes = [8, 32], strides = [1, 1]} : vector<8x128xf32> to vector<8x32xf32>
    %610 = math.tanh %609 : vector<8x32xf32>
    %611 = vector.extract_strided_slice %587 {offsets = [0, 96], sizes = [8, 32], strides = [1, 1]} : vector<8x128xf32> to vector<8x32xf32>
    %cst_242 = arith.constant 5.000000e-01 : f32
    %612 = vector.broadcast %cst_242 : f32 to vector<8x32xf32>
    %613 = arith.mulf %612, %611 : vector<8x32xf32>
    %614 = math.tanh %613 : vector<8x32xf32>
    %cst_243 = arith.constant 1.000000e+00 : f32
    %615 = vector.broadcast %cst_243 : f32 to vector<8x32xf32>
    %616 = arith.addf %614, %615 : vector<8x32xf32>
    %cst_244 = arith.constant 5.000000e-01 : f32
    %617 = vector.broadcast %cst_244 : f32 to vector<8x32xf32>
    %618 = arith.mulf %617, %616 : vector<8x32xf32>
    %619 = arith.mulf %608, %539 : vector<8x32xf32>
    %620 = arith.mulf %600, %610 : vector<8x32xf32>
    %621 = arith.addf %619, %620 : vector<8x32xf32>
    %622 = math.tanh %621 : vector<8x32xf32>
    %623 = arith.mulf %618, %622 : vector<8x32xf32>
    %624 = vector.extract_strided_slice %592 {offsets = [0, 0], sizes = [8, 32], strides = [1, 1]} : vector<8x128xf32> to vector<8x32xf32>
    %cst_245 = arith.constant 5.000000e-01 : f32
    %625 = vector.broadcast %cst_245 : f32 to vector<8x32xf32>
    %626 = arith.mulf %625, %624 : vector<8x32xf32>
    %627 = math.tanh %626 : vector<8x32xf32>
    %cst_246 = arith.constant 1.000000e+00 : f32
    %628 = vector.broadcast %cst_246 : f32 to vector<8x32xf32>
    %629 = arith.addf %627, %628 : vector<8x32xf32>
    %cst_247 = arith.constant 5.000000e-01 : f32
    %630 = vector.broadcast %cst_247 : f32 to vector<8x32xf32>
    %631 = arith.mulf %630, %629 : vector<8x32xf32>
    %632 = vector.extract_strided_slice %592 {offsets = [0, 32], sizes = [8, 32], strides = [1, 1]} : vector<8x128xf32> to vector<8x32xf32>
    %cst_248 = arith.constant 5.000000e-01 : f32
    %633 = vector.broadcast %cst_248 : f32 to vector<8x32xf32>
    %634 = arith.mulf %633, %632 : vector<8x32xf32>
    %635 = math.tanh %634 : vector<8x32xf32>
    %cst_249 = arith.constant 1.000000e+00 : f32
    %636 = vector.broadcast %cst_249 : f32 to vector<8x32xf32>
    %637 = arith.addf %635, %636 : vector<8x32xf32>
    %cst_250 = arith.constant 5.000000e-01 : f32
    %638 = vector.broadcast %cst_250 : f32 to vector<8x32xf32>
    %639 = arith.mulf %638, %637 : vector<8x32xf32>
    %640 = vector.extract_strided_slice %592 {offsets = [0, 64], sizes = [8, 32], strides = [1, 1]} : vector<8x128xf32> to vector<8x32xf32>
    %641 = math.tanh %640 : vector<8x32xf32>
    %642 = vector.extract_strided_slice %592 {offsets = [0, 96], sizes = [8, 32], strides = [1, 1]} : vector<8x128xf32> to vector<8x32xf32>
    %cst_251 = arith.constant 5.000000e-01 : f32
    %643 = vector.broadcast %cst_251 : f32 to vector<8x32xf32>
    %644 = arith.mulf %643, %642 : vector<8x32xf32>
    %645 = math.tanh %644 : vector<8x32xf32>
    %cst_252 = arith.constant 1.000000e+00 : f32
    %646 = vector.broadcast %cst_252 : f32 to vector<8x32xf32>
    %647 = arith.addf %645, %646 : vector<8x32xf32>
    %cst_253 = arith.constant 5.000000e-01 : f32
    %648 = vector.broadcast %cst_253 : f32 to vector<8x32xf32>
    %649 = arith.mulf %648, %647 : vector<8x32xf32>
    %650 = arith.mulf %639, %570 : vector<8x32xf32>
    %651 = arith.mulf %631, %641 : vector<8x32xf32>
    %652 = arith.addf %650, %651 : vector<8x32xf32>
    %653 = math.tanh %652 : vector<8x32xf32>
    %654 = arith.mulf %649, %653 : vector<8x32xf32>
    %655 = arith.truncf %623 : vector<8x32xf32> to vector<8x32xbf16>
    %656 = arith.truncf %654 : vector<8x32xf32> to vector<8x32xbf16>
    %657 = arith.truncf %623 : vector<8x32xf32> to vector<8x32xbf16>
    %c7_254 = arith.constant 7 : index
    %c0_255 = arith.constant 0 : index
    %c0_256 = arith.constant 0 : index
    %658 = vector.load %arg5[%c7_254, %c0_255, %c0_256] : memref<8x8x32xbf16, #tpu.memory_space<vmem>>, vector<1x8x32xbf16>
    %659 = vector.shape_cast %658 : vector<1x8x32xbf16> to vector<8x32xbf16>
    %660 = vector.shape_cast %657 : vector<8x32xbf16> to vector<1x8x32xbf16>
    tpu.vector_store %arg5[%c7_254, %c0_255, %c0_256], %660 {strides = array<i32>} : memref<8x8x32xbf16, #tpu.memory_space<vmem>>, vector<1x8x32xbf16>,
    %661 = arith.truncf %654 : vector<8x32xf32> to vector<8x32xbf16>
    %c0_257 = arith.constant 0 : index
    %c0_258 = arith.constant 0 : index
    %c0_259 = arith.constant 0 : index
    %662 = vector.load %arg6[%c0_257, %c0_258, %c0_259] : memref<8x8x32xbf16, #tpu.memory_space<vmem>>, vector<1x8x32xbf16>
    %663 = vector.shape_cast %662 : vector<1x8x32xbf16> to vector<8x32xbf16>
    %664 = vector.shape_cast %661 : vector<8x32xbf16> to vector<1x8x32xbf16>
    tpu.vector_store %arg6[%c0_257, %c0_258, %c0_259], %664 {strides = array<i32>} : memref<8x8x32xbf16, #tpu.memory_space<vmem>>, vector<1x8x32xbf16>,
    %c0_260 = arith.constant 0 : index
    %c0_261 = arith.constant 0 : index
    %665 = vector.load %arg7[%c0_260, %c0_261] : memref<8x32xbf16, #tpu.memory_space<vmem>>, vector<8x32xbf16>
    tpu.vector_store %arg7[%c0_260, %c0_261], %655 {strides = array<i32>} : memref<8x32xbf16, #tpu.memory_space<vmem>>, vector<8x32xbf16>,
    %c0_262 = arith.constant 0 : index
    %c0_263 = arith.constant 0 : index
    %666 = vector.load %arg8[%c0_262, %c0_263] : memref<8x32xbf16, #tpu.memory_space<vmem>>, vector<8x32xbf16>
    tpu.vector_store %arg8[%c0_262, %c0_263], %656 {strides = array<i32>} : memref<8x32xbf16, #tpu.memory_space<vmem>>, vector<8x32xbf16>,
    %c0_264 = arith.constant 0 : index
    %c0_265 = arith.constant 0 : index
    %667 = vector.load %arg9[%c0_264, %c0_265] : memref<8x32xf32, #tpu.memory_space<vmem>>, vector<8x32xf32>
    tpu.vector_store %arg9[%c0_264, %c0_265], %621 {strides = array<i32>} : memref<8x32xf32, #tpu.memory_space<vmem>>, vector<8x32xf32>,
    %c0_266 = arith.constant 0 : index
    %c0_267 = arith.constant 0 : index
    %668 = vector.load %arg10[%c0_266, %c0_267] : memref<8x32xf32, #tpu.memory_space<vmem>>, vector<8x32xf32>
    tpu.vector_store %arg10[%c0_266, %c0_267], %652 {strides = array<i32>} : memref<8x32xf32, #tpu.memory_space<vmem>>, vector<8x32xf32>,
    return
  }
  func.func @transform_0(%arg0: i32) -> (i32, i32, i32) {
    %c0_i32 = arith.constant 0 : i32
    %c0_i32_0 = arith.constant 0 : i32
    %c0_i32_1 = arith.constant 0 : i32
    return %arg0, %c0_i32, %c0_i32_0 : i32, i32, i32
  }
  func.func @transform_1(%arg0: i32) -> (i32, i32, i32) {
    %c0_i32 = arith.constant 0 : i32
    %c0_i32_0 = arith.constant 0 : i32
    %c0_i32_1 = arith.constant 0 : i32
    return %arg0, %c0_i32, %c0_i32_0 : i32, i32, i32
  }
  func.func @transform_2(%arg0: i32) -> (i32, i32) {
    %c0_i32 = arith.constant 0 : i32
    %c0_i32_0 = arith.constant 0 : i32
    %c0_i32_1 = arith.constant 0 : i32
    return %c0_i32, %c0_i32_0 : i32, i32
  }
  func.func @transform_3(%arg0: i32) -> (i32, i32) {
    %c0_i32 = arith.constant 0 : i32
    %c0_i32_0 = arith.constant 0 : i32
    %c0_i32_1 = arith.constant 0 : i32
    return %c0_i32, %c0_i32_0 : i32, i32
  }
  func.func @transform_4(%arg0: i32) -> (i32, i32, i32) {
    %c0_i32 = arith.constant 0 : i32
    %c0_i32_0 = arith.constant 0 : i32
    %c0_i32_1 = arith.constant 0 : i32
    return %arg0, %c0_i32, %c0_i32_0 : i32, i32, i32
  }
  func.func @transform_5(%arg0: i32) -> (i32, i32, i32) {
    %c0_i32 = arith.constant 0 : i32
    %0 = arith.subi %c0_i32, %arg0 : i32
    %c0_i32_0 = arith.constant 0 : i32
    %c0_i32_1 = arith.constant 0 : i32
    %c0_i32_2 = arith.constant 0 : i32
    return %0, %c0_i32_0, %c0_i32_1 : i32, i32, i32
  }
}

</mosaic_0001>

<llo_original>
// kernel: tpu_custom_call.1
$region0: #{tpu_custom_call.1}
  #allocation0 [shape = 'u32[]', space=smem, size = 0x4, offset = 0x4, fixed_abs, tag = 'smem constant byte address 0x4 - core index']
  #allocation1 [shape = 'u32[144,128]{1,0:T(1,128)}', space=vmem, size = 0x12000, scoped, tag = 'internal scratch']
  #allocation2 [shape = 'bf16[8,32]{1,0:T(8,128)(2,1)}', space=vmem, size = 0x800, scoped, tag = 'scratch operand']
  #allocation3 [shape = 'bf16[8,32]{1,0:T(8,128)(2,1)}', space=vmem, size = 0x800, scoped, tag = 'scratch operand']
  #allocation4 [shape = 'f32[8,32]{1,0:T(8,128)}', space=vmem, size = 0x1000, scoped, tag = 'scratch operand']
  #allocation5 [shape = 'f32[8,32]{1,0:T(8,128)}', space=vmem, size = 0x1000, scoped, tag = 'scratch operand']
  %s0 = inlined_call_operand.hbm [shape: bf16[8,8,128], index: 0, kind: input, shape index: {}]
  %s1 = inlined_call_operand.hbm [shape: bf16[8,8,128], index: 1, kind: input, shape index: {}]
  %s2 = inlined_call_operand.hbm [shape: bf16[32,128], index: 2, kind: input, shape index: {}]
  %s3 = inlined_call_operand.hbm [shape: bf16[32,128], index: 3, kind: input, shape index: {}]
  %s4 = inlined_call_operand.hbm [shape: bf16[8,8,32], index: 4, kind: output, shape index: {0}]
  %s5 = inlined_call_operand.hbm [shape: bf16[8,8,32], index: 5, kind: output, shape index: {1}]
  %6 = xla_tuple %s4, %s5
  %s7 = sld [smem:[#allocation0]]
  $region54: #{tpu_custom_call.1} parent=0
    _
  %s9 = ssub.s32 1, %s7
  %s10 = scalar_select 0, %s9, %s7
  $region1: #{tpu_custom_call.1} parent=0
    #allocation6 [shape = 'u8[16384]{0}', space=vmem, size = 0x4000, scoped, tag = 'input window, operand 0, single buffered']
    #allocation7 [shape = 's32[1]{0}', space=sflag, size = 0x4, scoped, tag = 'scoped memory for tpu_custom_call.1']
    #allocation8 [shape = 's32[1]{0}', space=sflag, size = 0x4, scoped, tag = 'scoped memory for tpu_custom_call.1']
    #allocation9 [shape = 'u8[16384]{0}', space=vmem, size = 0x4000, scoped, tag = 'input window, operand 1, single buffered']
    #allocation10 [shape = 's32[1]{0}', space=sflag, size = 0x4, scoped, tag = 'scoped memory for tpu_custom_call.1']
    #allocation11 [shape = 'u8[8192]{0}', space=vmem, size = 0x2000, scoped, tag = 'input window, operand 2, single buffered']
    #allocation12 [shape = 'u8[8192]{0}', space=vmem, size = 0x2000, scoped, tag = 'input window, operand 3, single buffered']
    #allocation13 [shape = 's32[1]{0}', space=sflag, size = 0x4, scoped, tag = 'scoped memory for tpu_custom_call.1']
    #allocation14 [shape = 'u8[16384]{0}', space=vmem, size = 0x4000, scoped, tag = 'output window, operand 0, single buffered']
    #allocation15 [shape = 'u8[16384]{0}', space=vmem, size = 0x4000, scoped, tag = 'output window, operand 1, single buffered']
    #allocation16 [shape = 's32[1]{0}', space=sflag, size = 0x4, scoped, tag = 'scoped memory for tpu_custom_call.1']
    %11 = vsyncpa [#allocation7], 0
    %12 = vsyncpa [#allocation10], 0
    %13 = vsyncpa [#allocation13], 0
    %14 = vsyncpa [#allocation8], 0
    %15 = vsyncpa [#allocation16], 0
    // Predicated region
    $region2: #{tpu_custom_call.1} parent=1 // pred_check
      _
    $region3: #{tpu_custom_call.1} parent=1 // pred_check_branch
      %17 = sbr.rel (0) target = $region5
    $region4: #{tpu_custom_call.1} parent=1 // pred_region
      %s19 = ssub.s32 512, 512
      %20 = vsyncadd [#allocation7], %s19
      %s21 = sshll.u32 [#allocation6], 4
      %s22 = int_to_ptr.vmem [resolvable:$true] %s21
      %27 = dma.hbm_to_vmem [thread:$0]  %s0, 512, %s22, [#allocation7], 64, 64, 4
    $region5: #{tpu_custom_call.1} parent=1 // pred_fallthru
      _
    // Predicated region
    $region6: #{tpu_custom_call.1} parent=1 // pred_check
      _
    $region7: #{tpu_custom_call.1} parent=1 // pred_check_branch
      %29 = sbr.rel (0) target = $region9
    $region8: #{tpu_custom_call.1} parent=1 // pred_region
      %s31 = ssub.s32 512, 512
      %32 = vsyncadd [#allocation10], %s31
      %s33 = sshll.u32 [#allocation9], 4
      %s34 = int_to_ptr.vmem [resolvable:$true] %s33
      %39 = dma.hbm_to_vmem [thread:$0]  %s1, 512, %s34, [#allocation10], 64, 64, 4
    $region9: #{tpu_custom_call.1} parent=1 // pred_fallthru
      _
    // Predicated region
    $region10: #{tpu_custom_call.1} parent=1 // pred_check
      _
    $region11: #{tpu_custom_call.1} parent=1 // pred_check_branch
      %41 = sbr.rel (0) target = $region13
    $region12: #{tpu_custom_call.1} parent=1 // pred_region
      %s43 = ssub.s32 256, 256
      %44 = vsyncadd [#allocation10], %s43
      %s45 = sshll.u32 [#allocation11], 4
      %s46 = int_to_ptr.vmem [resolvable:$true] %s45
      %51 = dma.hbm_to_vmem [thread:$0]  %s2, 256, %s46, [#allocation10], 64, 64, 4
    $region13: #{tpu_custom_call.1} parent=1 // pred_fallthru
      _
    // Predicated region
    $region14: #{tpu_custom_call.1} parent=1 // pred_check
      _
    $region15: #{tpu_custom_call.1} parent=1 // pred_check_branch
      %53 = sbr.rel (0) target = $region17
    $region16: #{tpu_custom_call.1} parent=1 // pred_region
      %s55 = ssub.s32 256, 256
      %56 = vsyncadd [#allocation13], %s55
      %s57 = sshll.u32 [#allocation12], 4
      %s58 = int_to_ptr.vmem [resolvable:$true] %s57
      %63 = dma.hbm_to_vmem [thread:$0]  %s3, 256, %s58, [#allocation13], 64, 64, 4
    $region17: #{tpu_custom_call.1} parent=1 // pred_fallthru
      _
    // Predicated region
    $region18: #{tpu_custom_call.1} parent=1 // pred_check
      _
    $region19: #{tpu_custom_call.1} parent=1 // pred_check_branch
      %65 = sbr.rel (0) target = $region21
    $region20: #{tpu_custom_call.1} parent=1 // pred_region
      %66 = dma.done [#allocation7], 512
    $region21: #{tpu_custom_call.1} parent=1 // pred_fallthru
      _
    // Predicated region
    $region22: #{tpu_custom_call.1} parent=1 // pred_check
      _
    $region23: #{tpu_custom_call.1} parent=1 // pred_check_branch
      %68 = sbr.rel (0) target = $region25
    $region24: #{tpu_custom_call.1} parent=1 // pred_region
      %69 = dma.done [#allocation10], 512
    $region25: #{tpu_custom_call.1} parent=1 // pred_fallthru
      _
    // Predicated region
    $region26: #{tpu_custom_call.1} parent=1 // pred_check
      _
    $region27: #{tpu_custom_call.1} parent=1 // pred_check_branch
      %71 = sbr.rel (0) target = $region29
    $region28: #{tpu_custom_call.1} parent=1 // pred_region
      %72 = dma.done [#allocation10], 256
    $region29: #{tpu_custom_call.1} parent=1 // pred_fallthru
      _
    // Predicated region
    $region30: #{tpu_custom_call.1} parent=1 // pred_check
      _
    $region31: #{tpu_custom_call.1} parent=1 // pred_check_branch
      %74 = sbr.rel (0) target = $region33
    $region32: #{tpu_custom_call.1} parent=1 // pred_region
      %75 = dma.done [#allocation13], 256
    $region33: #{tpu_custom_call.1} parent=1 // pred_fallthru
      _
    %s76 = ssub.s32 0, 0
    %s77 = smul.u32 8, %s76
    %p79 = scmp.eq.s32.totalorder 0, 0
    // Predicated region
    $region34: #{tpu_custom_call.1} parent=1 // pred_check
      %p80 = pneg %p79
    $region35: #{tpu_custom_call.1} parent=1 // pred_check_branch
      %82 = sbr.rel (%p80) target = $region37
    $region36: #{tpu_custom_call.1} parent=1 // pred_region
      %vm83 = vcmask 257024
      %84 = vst.msk [vmem:[#allocation2] sm:$0xf] %vm83, 0
      %85 = vst.msk [vmem:[#allocation3] sm:$0xf] %vm83, 0
      %vm86 = vcmask 261120
      %87 = vst.msk [vmem:[#allocation4] sm:$0xff] %vm86, 0.0
      %88 = vst.msk [vmem:[#allocation5] sm:$0xff] %vm86, 0.0
    $region37: #{tpu_custom_call.1} parent=1 // pred_fallthru
      _
    %v89 = vld [vmem:[#allocation11] sm:$0xf]
    %v90 = vld [vmem:[#allocation11 + $0x4] sm:$0xf]
    %v91 = vld [vmem:[#allocation11 + $0x8] sm:$0xf]
    %v92 = vld [vmem:[#allocation11 + $0xc] sm:$0xf]
    %v93 = vld [vmem:[#allocation12] sm:$0xf]
    %v94 = vld [vmem:[#allocation12 + $0x4] sm:$0xf]
    %v95 = vld [vmem:[#allocation12 + $0x8] sm:$0xf]
    %v96 = vld [vmem:[#allocation12 + $0xc] sm:$0xf]
    %v97 = vld [vmem:[#allocation2] sm:$0xf]
    %v98 = vld [vmem:[#allocation3] sm:$0xf]
    %v99 = vld [vmem:[#allocation4] sm:$0xff]
    %v100 = vld [vmem:[#allocation5] sm:$0xff]
    %v101 = vld [vmem:[#allocation6] sm:$0xf]
    %v102 = vunpack.c.l.bf16 %v101
    %v107 = vunpack.c.l.b16 %v89
    %v108 = vunpack.c.l.b16 %v90
    %v109 = vunpack.c.l.b16 %v91
    %v110 = vunpack.c.l.b16 %v92
    %v111 = vpack.c.b16 %v108, %v107
    %v112 = vpack.c.b16 %v110, %v109
    %vm115 = vcmask 261120
    %v117 = vsel %vm115, %v97, 0
    %119 = vmatprep.subr.bf16.mxu0 0
    %120 = vmatpush1.bf16.msra.mxu0 %v111
    %121 = vmatprep.subr.bf16.mxu0 0
    %122 = vmatpush1.bf16.msra.mxu0 %v112
    %123 = vmatprep.subr.bf16.mxu0 0
    %124 = vmatpush1.bf16.msra.mxu0 0
    %125 = vmatprep.subr.bf16.mxu0 0
    %126 = vmatpush1.bf16.msra.mxu0 0
    %127 = vmatprep.subr.bf16.mxu0 0
    %128 = vmatpush1.bf16.msra.mxu0 0
    %129 = vmatprep.subr.bf16.mxu0 0
    %130 = vmatpush1.bf16.msra.mxu0 0
    %131 = vmatprep.subr.bf16.mxu0 0
    %132 = vmatpush1.bf16.msra.mxu0 0
    %133 = vmatprep.subr.bf16.mxu0 0
    %134 = vmatpush1.bf16.msra.mxu0 0
    %135 = vmatprep.subr.bf16.mxu0 0
    %136 = vmatpush1.bf16.msra.mxu0 0
    %137 = vmatprep.subr.bf16.mxu0 0
    %138 = vmatpush1.bf16.msra.mxu0 0
    %139 = vmatprep.subr.bf16.mxu0 0
    %140 = vmatpush1.bf16.msra.mxu0 0
    %141 = vmatprep.subr.bf16.mxu0 0
    %142 = vmatpush1.bf16.msra.mxu0 0
    %143 = vmatprep.subr.bf16.mxu0 0
    %144 = vmatpush1.bf16.msra.mxu0 0
    %145 = vmatprep.subr.bf16.mxu0 0
    %146 = vmatpush1.bf16.msra.mxu0 0
    %147 = vmatprep.subr.bf16.mxu0 0
    %148 = vmatpush1.bf16.msra.mxu0 0
    %149 = vmatprep.subr.bf16.mxu0 0
    %150 = vmatpush1.bf16.msra.mxu0 0
    %151 = vmatprep.mubr.bf16.mxu0 0
    %152 = vmatmul.mubr.bf16.gmra.mrb[0].mxu0 %v117
    %v153 = vpop.f32.mrb[0].mxu0
    %v154 = vadd.f32 0.0, %v153
    %v155 = vpop.f32.mrb[0].mxu0
    %v156 = vpop.f32.mrb[0].mxu0
    %v157 = vpop.f32.mrb[0].mxu0
    %158 = vdwg.mxu0
    %v159 = vadd.f32 %v102, %v154
    %v160 = vld [vmem:[#allocation9] sm:$0xf]
    %v161 = vunpack.c.l.bf16 %v160
    %v166 = vunpack.c.l.b16 %v93
    %v167 = vunpack.c.l.b16 %v94
    %v168 = vunpack.c.l.b16 %v95
    %v169 = vunpack.c.l.b16 %v96
    %v170 = vpack.c.b16 %v167, %v166
    %v171 = vpack.c.b16 %v169, %v168
    %v175 = vsel %vm115, %v98, 0
    %177 = vmatprep.subr.bf16.mxu0 0
    %178 = vmatpush1.bf16.msra.mxu0 %v170
    %179 = vmatprep.subr.bf16.mxu0 0
    %180 = vmatpush1.bf16.msra.mxu0 %v171
    %181 = vmatprep.subr.bf16.mxu0 0
    %182 = vmatpush1.bf16.msra.mxu0 0
    %183 = vmatprep.subr.bf16.mxu0 0
    %184 = vmatpush1.bf16.msra.mxu0 0
    %185 = vmatprep.subr.bf16.mxu0 0
    %186 = vmatpush1.bf16.msra.mxu0 0
    %187 = vmatprep.subr.bf16.mxu0 0
    %188 = vmatpush1.bf16.msra.mxu0 0
    %189 = vmatprep.subr.bf16.mxu0 0
    %190 = vmatpush1.bf16.msra.mxu0 0
    %191 = vmatprep.subr.bf16.mxu0 0
    %192 = vmatpush1.bf16.msra.mxu0 0
    %193 = vmatprep.subr.bf16.mxu0 0
    %194 = vmatpush1.bf16.msra.mxu0 0
    %195 = vmatprep.subr.bf16.mxu0 0
    %196 = vmatpush1.bf16.msra.mxu0 0
    %197 = vmatprep.subr.bf16.mxu0 0
    %198 = vmatpush1.bf16.msra.mxu0 0
    %199 = vmatprep.subr.bf16.mxu0 0
    %200 = vmatpush1.bf16.msra.mxu0 0
    %201 = vmatprep.subr.bf16.mxu0 0
    %202 = vmatpush1.bf16.msra.mxu0 0
    %203 = vmatprep.subr.bf16.mxu0 0
    %204 = vmatpush1.bf16.msra.mxu0 0
    %205 = vmatprep.subr.bf16.mxu0 0
    %206 = vmatpush1.bf16.msra.mxu0 0
    %207 = vmatprep.subr.bf16.mxu0 0
    %208 = vmatpush1.bf16.msra.mxu0 0
    %209 = vmatprep.mubr.bf16.mxu0 0
    %210 = vmatmul.mubr.bf16.gmra.mrb[0].mxu0 %v175
    %v211 = vpop.f32.mrb[0].mxu0
    %v212 = vadd.f32 0.0, %v211
    %v213 = vpop.f32.mrb[0].mxu0
    %v214 = vpop.f32.mrb[0].mxu0
    %v215 = vpop.f32.mrb[0].mxu0
    %216 = vdwg.mxu0
    %v217 = vadd.f32 %v161, %v212
    %v218 = vmul.f32 %v159, 0.5
    %v219 = vtanh.pop %v218
    %v220 = vadd.f32 %v219, 1.0
    %v221 = vmul.f32 %v220, 0.5
    %v222 = vtanh.pop %v159
    %224 = vrot.lane.b32.xlu0 %v99, 32
    %v225 = vpop.permute.xlu0 %224
    %v227 = vmul.f32 %v221, %v225
    %229 = vrot.lane.b32.xlu0 %v222, 64
    %v230 = vpop.permute.xlu0 %229
    %v232 = vmul.f32 %v221, %v230
    %234 = vrot.lane.b32.xlu0 %v232, 32
    %v235 = vpop.permute.xlu0 %234
    %v237 = vadd.f32 %v227, %v235
    %v238 = vtanh.pop %v237
    %240 = vrot.lane.b32.xlu0 %v238, 64
    %v241 = vpop.permute.xlu0 %240
    %v243 = vmul.f32 %v221, %v241
    %v244 = vmul.f32 %v217, 0.5
    %v245 = vtanh.pop %v244
    %v246 = vadd.f32 %v245, 1.0
    %v247 = vmul.f32 %v246, 0.5
    %v248 = vtanh.pop %v217
    %250 = vrot.lane.b32.xlu0 %v100, 32
    %v251 = vpop.permute.xlu0 %250
    %v253 = vmul.f32 %v247, %v251
    %255 = vrot.lane.b32.xlu0 %v248, 64
    %v256 = vpop.permute.xlu0 %255
    %v258 = vmul.f32 %v247, %v256
    %260 = vrot.lane.b32.xlu0 %v258, 32
    %v261 = vpop.permute.xlu0 %260
    %v263 = vadd.f32 %v253, %v261
    %v264 = vtanh.pop %v263
    %266 = vrot.lane.b32.xlu0 %v264, 64
    %v267 = vpop.permute.xlu0 %266
    %v269 = vmul.f32 %v247, %v267
    %v270 = vpack.c.bf16 %v243, %v243
    %v271 = vpack.c.bf16 %v269, %v269
    %v273 = vunpack.c.l.b16 %v270
    %v274 = vpack.c.b16 %v273, %v273
    %275 = vrot.lane.b32.xlu0 %v274, 32
    %v276 = vpop.permute.xlu0 %275
    %vm278 = vcmask 257024
    %279 = vst.msk [vmem:[#allocation14] sm:$0xf] %vm278, %v276
    %v281 = vunpack.c.l.b16 %v271
    %v282 = vpack.c.b16 %v281, %v281
    %283 = vrot.lane.b32.xlu0 %v282, 32
    %v284 = vpop.permute.xlu0 %283
    %s286 = scalar_lea.vmem [#allocation15], 28
    %287 = vst.msk [vmem:[%s286] sm:$0xf] %vm278, %v284
    %s288 = scalar_lea.vmem [#allocation6], 4
    %v289 = vld [vmem:[%s288] sm:$0xf]
    %v290 = vunpack.c.l.bf16 %v289
    %291 = vrot.lane.b32.xlu0 %v270, 32
    %v292 = vpop.permute.xlu0 %291
    %v294 = vsel %vm115, %v292, 0
    %296 = vmatprep.subr.bf16.mxu0 0
    %297 = vmatpush1.bf16.msra.mxu0 %v111
    %298 = vmatprep.subr.bf16.mxu0 0
    %299 = vmatpush1.bf16.msra.mxu0 %v112
    %300 = vmatprep.subr.bf16.mxu0 0
    %301 = vmatpush1.bf16.msra.mxu0 0
    %302 = vmatprep.subr.bf16.mxu0 0
    %303 = vmatpush1.bf16.msra.mxu0 0
    %304 = vmatprep.subr.bf16.mxu0 0
    %305 = vmatpush1.bf16.msra.mxu0 0
    %306 = vmatprep.subr.bf16.mxu0 0
    %307 = vmatpush1.bf16.msra.mxu0 0
    %308 = vmatprep.subr.bf16.mxu0 0
    %309 = vmatpush1.bf16.msra.mxu0 0
    %310 = vmatprep.subr.bf16.mxu0 0
    %311 = vmatpush1.bf16.msra.mxu0 0
    %312 = vmatprep.subr.bf16.mxu0 0
    %313 = vmatpush1.bf16.msra.mxu0 0
    %314 = vmatprep.subr.bf16.mxu0 0
    %315 = vmatpush1.bf16.msra.mxu0 0
    %316 = vmatprep.subr.bf16.mxu0 0
    %317 = vmatpush1.bf16.msra.mxu0 0
    %318 = vmatprep.subr.bf16.mxu0 0
    %319 = vmatpush1.bf16.msra.mxu0 0
    %320 = vmatprep.subr.bf16.mxu0 0
    %321 = vmatpush1.bf16.msra.mxu0 0
    %322 = vmatprep.subr.bf16.mxu0 0
    %323 = vmatpush1.bf16.msra.mxu0 0
    %324 = vmatprep.subr.bf16.mxu0 0
    %325 = vmatpush1.bf16.msra.mxu0 0
    %326 = vmatprep.subr.bf16.mxu0 0
    %327 = vmatpush1.bf16.msra.mxu0 0
    %328 = vmatprep.mubr.bf16.mxu0 0
    %329 = vmatmul.mubr.bf16.gmra.mrb[0].mxu0 %v294
    %v330 = vpop.f32.mrb[0].mxu0
    %v331 = vadd.f32 0.0, %v330
    %v332 = vpop.f32.mrb[0].mxu0
    %v333 = vpop.f32.mrb[0].mxu0
    %v334 = vpop.f32.mrb[0].mxu0
    %335 = vdwg.mxu0
    %v336 = vadd.f32 %v290, %v331
    %s337 = scalar_lea.vmem [#allocation9], 4
    %v338 = vld [vmem:[%s337] sm:$0xf]
    %v339 = vunpack.c.l.bf16 %v338
    %340 = vrot.lane.b32.xlu0 %v271, 32
    %v341 = vpop.permute.xlu0 %340
    %v343 = vsel %vm115, %v341, 0
    %345 = vmatprep.subr.bf16.mxu0 0
    %346 = vmatpush1.bf16.msra.mxu0 %v170
    %347 = vmatprep.subr.bf16.mxu0 0
    %348 = vmatpush1.bf16.msra.mxu0 %v171
    %349 = vmatprep.subr.bf16.mxu0 0
    %350 = vmatpush1.bf16.msra.mxu0 0
    %351 = vmatprep.subr.bf16.mxu0 0
    %352 = vmatpush1.bf16.msra.mxu0 0
    %353 = vmatprep.subr.bf16.mxu0 0
    %354 = vmatpush1.bf16.msra.mxu0 0
    %355 = vmatprep.subr.bf16.mxu0 0
    %356 = vmatpush1.bf16.msra.mxu0 0
    %357 = vmatprep.subr.bf16.mxu0 0
    %358 = vmatpush1.bf16.msra.mxu0 0
    %359 = vmatprep.subr.bf16.mxu0 0
    %360 = vmatpush1.bf16.msra.mxu0 0
    %361 = vmatprep.subr.bf16.mxu0 0
    %362 = vmatpush1.bf16.msra.mxu0 0
    %363 = vmatprep.subr.bf16.mxu0 0
    %364 = vmatpush1.bf16.msra.mxu0 0
    %365 = vmatprep.subr.bf16.mxu0 0
    %366 = vmatpush1.bf16.msra.mxu0 0
    %367 = vmatprep.subr.bf16.mxu0 0
    %368 = vmatpush1.bf16.msra.mxu0 0
    %369 = vmatprep.subr.bf16.mxu0 0
    %370 = vmatpush1.bf16.msra.mxu0 0
    %371 = vmatprep.subr.bf16.mxu0 0
    %372 = vmatpush1.bf16.msra.mxu0 0
    %373 = vmatprep.subr.bf16.mxu0 0
    %374 = vmatpush1.bf16.msra.mxu0 0
    %375 = vmatprep.subr.bf16.mxu0 0
    %376 = vmatpush1.bf16.msra.mxu0 0
    %377 = vmatprep.mubr.bf16.mxu0 0
    %378 = vmatmul.mubr.bf16.gmra.mrb[0].mxu0 %v343
    %v379 = vpop.f32.mrb[0].mxu0
    %v380 = vadd.f32 0.0, %v379
    %v381 = vpop.f32.mrb[0].mxu0
    %v382 = vpop.f32.mrb[0].mxu0
    %v383 = vpop.f32.mrb[0].mxu0
    %384 = vdwg.mxu0
    %v385 = vadd.f32 %v339, %v380
    %v386 = vmul.f32 %v336, 0.5
    %v387 = vtanh.pop %v386
    %v388 = vadd.f32 %v387, 1.0
    %v389 = vmul.f32 %v388, 0.5
    %v390 = vtanh.pop %v336
    %v391 = vmul.f32 %v389, %v237
    %393 = vrot.lane.b32.xlu0 %v390, 64
    %v394 = vpop.permute.xlu0 %393
    %v396 = vmul.f32 %v389, %v394
    %398 = vrot.lane.b32.xlu0 %v396, 32
    %v399 = vpop.permute.xlu0 %398
    %v401 = vadd.f32 %v391, %v399
    %v402 = vtanh.pop %v401
    %404 = vrot.lane.b32.xlu0 %v402, 64
    %v405 = vpop.permute.xlu0 %404
    %v407 = vmul.f32 %v389, %v405
    %v408 = vmul.f32 %v385, 0.5
    %v409 = vtanh.pop %v408
    %v410 = vadd.f32 %v409, 1.0
    %v411 = vmul.f32 %v410, 0.5
    %v412 = vtanh.pop %v385
    %v413 = vmul.f32 %v411, %v263
    %415 = vrot.lane.b32.xlu0 %v412, 64
    %v416 = vpop.permute.xlu0 %415
    %v418 = vmul.f32 %v411, %v416
    %420 = vrot.lane.b32.xlu0 %v418, 32
    %v421 = vpop.permute.xlu0 %420
    %v423 = vadd.f32 %v413, %v421
    %v424 = vtanh.pop %v423
    %426 = vrot.lane.b32.xlu0 %v424, 64
    %v427 = vpop.permute.xlu0 %426
    %v429 = vmul.f32 %v411, %v427
    %v430 = vpack.c.bf16 %v407, %v407
    %v431 = vpack.c.bf16 %v429, %v429
    %v433 = vunpack.c.l.b16 %v430
    %v434 = vpack.c.b16 %v433, %v433
    %435 = vrot.lane.b32.xlu0 %v434, 32
    %v436 = vpop.permute.xlu0 %435
    %s438 = scalar_lea.vmem [#allocation14], 4
    %439 = vst.msk [vmem:[%s438] sm:$0xf] %vm278, %v436
    %v441 = vunpack.c.l.b16 %v431
    %v442 = vpack.c.b16 %v441, %v441
    %443 = vrot.lane.b32.xlu0 %v442, 32
    %v444 = vpop.permute.xlu0 %443
    %s446 = scalar_lea.vmem [#allocation15], 24
    %447 = vst.msk [vmem:[%s446] sm:$0xf] %vm278, %v444
    %s448 = scalar_lea.vmem [#allocation6], 8
    %v449 = vld [vmem:[%s448] sm:$0xf]
    %v450 = vunpack.c.l.bf16 %v449
    %451 = vrot.lane.b32.xlu0 %v430, 32
    %v452 = vpop.permute.xlu0 %451
    %v454 = vsel %vm115, %v452, 0
    %456 = vmatprep.subr.bf16.mxu0 0
    %457 = vmatpush1.bf16.msra.mxu0 %v111
    %458 = vmatprep.subr.bf16.mxu0 0
    %459 = vmatpush1.bf16.msra.mxu0 %v112
    %460 = vmatprep.subr.bf16.mxu0 0
    %461 = vmatpush1.bf16.msra.mxu0 0
    %462 = vmatprep.subr.bf16.mxu0 0
    %463 = vmatpush1.bf16.msra.mxu0 0
    %464 = vmatprep.subr.bf16.mxu0 0
    %465 = vmatpush1.bf16.msra.mxu0 0
    %466 = vmatprep.subr.bf16.mxu0 0
    %467 = vmatpush1.bf16.msra.mxu0 0
    %468 = vmatprep.subr.bf16.mxu0 0
    %469 = vmatpush1.bf16.msra.mxu0 0
    %470 = vmatprep.subr.bf16.mxu0 0
    %471 = vmatpush1.bf16.msra.mxu0 0
    %472 = vmatprep.subr.bf16.mxu0 0
    %473 = vmatpush1.bf16.msra.mxu0 0
    %474 = vmatprep.subr.bf16.mxu0 0
    %475 = vmatpush1.bf16.msra.mxu0 0
    %476 = vmatprep.subr.bf16.mxu0 0
    %477 = vmatpush1.bf16.msra.mxu0 0
    %478 = vmatprep.subr.bf16.mxu0 0
    %479 = vmatpush1.bf16.msra.mxu0 0
    %480 = vmatprep.subr.bf16.mxu0 0
    %481 = vmatpush1.bf16.msra.mxu0 0
    %482 = vmatprep.subr.bf16.mxu0 0
    %483 = vmatpush1.bf16.msra.mxu0 0
    %484 = vmatprep.subr.bf16.mxu0 0
    %485 = vmatpush1.bf16.msra.mxu0 0
    %486 = vmatprep.subr.bf16.mxu0 0
    %487 = vmatpush1.bf16.msra.mxu0 0
    %488 = vmatprep.mubr.bf16.mxu0 0
    %489 = vmatmul.mubr.bf16.gmra.mrb[0].mxu0 %v454
    %v490 = vpop.f32.mrb[0].mxu0
    %v491 = vadd.f32 0.0, %v490
    %v492 = vpop.f32.mrb[0].mxu0
    %v493 = vpop.f32.mrb[0].mxu0
    %v494 = vpop.f32.mrb[0].mxu0
    %495 = vdwg.mxu0
    %v496 = vadd.f32 %v450, %v491
    %s497 = scalar_lea.vmem [#allocation9], 8
    %v498 = vld [vmem:[%s497] sm:$0xf]
    %v499 = vunpack.c.l.bf16 %v498
    %500 = vrot.lane.b32.xlu0 %v431, 32
    %v501 = vpop.permute.xlu0 %500
    %v503 = vsel %vm115, %v501, 0
    %505 = vmatprep.subr.bf16.mxu0 0
    %506 = vmatpush1.bf16.msra.mxu0 %v170
    %507 = vmatprep.subr.bf16.mxu0 0
    %508 = vmatpush1.bf16.msra.mxu0 %v171
    %509 = vmatprep.subr.bf16.mxu0 0
    %510 = vmatpush1.bf16.msra.mxu0 0
    %511 = vmatprep.subr.bf16.mxu0 0
    %512 = vmatpush1.bf16.msra.mxu0 0
    %513 = vmatprep.subr.bf16.mxu0 0
    %514 = vmatpush1.bf16.msra.mxu0 0
    %515 = vmatprep.subr.bf16.mxu0 0
    %516 = vmatpush1.bf16.msra.mxu0 0
    %517 = vmatprep.subr.bf16.mxu0 0
    %518 = vmatpush1.bf16.msra.mxu0 0
    %519 = vmatprep.subr.bf16.mxu0 0
    %520 = vmatpush1.bf16.msra.mxu0 0
    %521 = vmatprep.subr.bf16.mxu0 0
    %522 = vmatpush1.bf16.msra.mxu0 0
    %523 = vmatprep.subr.bf16.mxu0 0
    %524 = vmatpush1.bf16.msra.mxu0 0
    %525 = vmatprep.subr.bf16.mxu0 0
    %526 = vmatpush1.bf16.msra.mxu0 0
    %527 = vmatprep.subr.bf16.mxu0 0
    %528 = vmatpush1.bf16.msra.mxu0 0
    %529 = vmatprep.subr.bf16.mxu0 0
    %530 = vmatpush1.bf16.msra.mxu0 0
    %531 = vmatprep.subr.bf16.mxu0 0
    %532 = vmatpush1.bf16.msra.mxu0 0
    %533 = vmatprep.subr.bf16.mxu0 0
    %534 = vmatpush1.bf16.msra.mxu0 0
    %535 = vmatprep.subr.bf16.mxu0 0
    %536 = vmatpush1.bf16.msra.mxu0 0
    %537 = vmatprep.mubr.bf16.mxu0 0
    %538 = vmatmul.mubr.bf16.gmra.mrb[0].mxu0 %v503
    %v539 = vpop.f32.mrb[0].mxu0
    %v540 = vadd.f32 0.0, %v539
    %v541 = vpop.f32.mrb[0].mxu0
    %v542 = vpop.f32.mrb[0].mxu0
    %v543 = vpop.f32.mrb[0].mxu0
    %544 = vdwg.mxu0
    %v545 = vadd.f32 %v499, %v540
    %v546 = vmul.f32 %v496, 0.5
    %v547 = vtanh.pop %v546
    %v548 = vadd.f32 %v547, 1.0
    %v549 = vmul.f32 %v548, 0.5
    %v550 = vtanh.pop %v496
    %v551 = vmul.f32 %v549, %v401
    %553 = vrot.lane.b32.xlu0 %v550, 64
    %v554 = vpop.permute.xlu0 %553
    %v556 = vmul.f32 %v549, %v554
    %558 = vrot.lane.b32.xlu0 %v556, 32
    %v559 = vpop.permute.xlu0 %558
    %v561 = vadd.f32 %v551, %v559
    %v562 = vtanh.pop %v561
    %564 = vrot.lane.b32.xlu0 %v562, 64
    %v565 = vpop.permute.xlu0 %564
    %v567 = vmul.f32 %v549, %v565
    %v568 = vmul.f32 %v545, 0.5
    %v569 = vtanh.pop %v568
    %v570 = vadd.f32 %v569, 1.0
    %v571 = vmul.f32 %v570, 0.5
    %v572 = vtanh.pop %v545
    %v573 = vmul.f32 %v571, %v423
    %575 = vrot.lane.b32.xlu0 %v572, 64
    %v576 = vpop.permute.xlu0 %575
    %v578 = vmul.f32 %v571, %v576
    %580 = vrot.lane.b32.xlu0 %v578, 32
    %v581 = vpop.permute.xlu0 %580
    %v583 = vadd.f32 %v573, %v581
    %v584 = vtanh.pop %v583
    %586 = vrot.lane.b32.xlu0 %v584, 64
    %v587 = vpop.permute.xlu0 %586
    %v589 = vmul.f32 %v571, %v587
    %v590 = vpack.c.bf16 %v567, %v567
    %v591 = vpack.c.bf16 %v589, %v589
    %v593 = vunpack.c.l.b16 %v590
    %v594 = vpack.c.b16 %v593, %v593
    %595 = vrot.lane.b32.xlu0 %v594, 32
    %v596 = vpop.permute.xlu0 %595
    %s598 = scalar_lea.vmem [#allocation14], 8
    %599 = vst.msk [vmem:[%s598] sm:$0xf] %vm278, %v596
    %v601 = vunpack.c.l.b16 %v591
    %v602 = vpack.c.b16 %v601, %v601
    %603 = vrot.lane.b32.xlu0 %v602, 32
    %v604 = vpop.permute.xlu0 %603
    %s606 = scalar_lea.vmem [#allocation15], 20
    %607 = vst.msk [vmem:[%s606] sm:$0xf] %vm278, %v604
    %s608 = scalar_lea.vmem [#allocation6], 12
    %v609 = vld [vmem:[%s608] sm:$0xf]
    %v610 = vunpack.c.l.bf16 %v609
    %611 = vrot.lane.b32.xlu0 %v590, 32
    %v612 = vpop.permute.xlu0 %611
    %v614 = vsel %vm115, %v612, 0
    %616 = vmatprep.subr.bf16.mxu0 0
    %617 = vmatpush1.bf16.msra.mxu0 %v111
    %618 = vmatprep.subr.bf16.mxu0 0
    %619 = vmatpush1.bf16.msra.mxu0 %v112
    %620 = vmatprep.subr.bf16.mxu0 0
    %621 = vmatpush1.bf16.msra.mxu0 0
    %622 = vmatprep.subr.bf16.mxu0 0
    %623 = vmatpush1.bf16.msra.mxu0 0
    %624 = vmatprep.subr.bf16.mxu0 0
    %625 = vmatpush1.bf16.msra.mxu0 0
    %626 = vmatprep.subr.bf16.mxu0 0
    %627 = vmatpush1.bf16.msra.mxu0 0
    %628 = vmatprep.subr.bf16.mxu0 0
    %629 = vmatpush1.bf16.msra.mxu0 0
    %630 = vmatprep.subr.bf16.mxu0 0
    %631 = vmatpush1.bf16.msra.mxu0 0
    %632 = vmatprep.subr.bf16.mxu0 0
    %633 = vmatpush1.bf16.msra.mxu0 0
    %634 = vmatprep.subr.bf16.mxu0 0
    %635 = vmatpush1.bf16.msra.mxu0 0
    %636 = vmatprep.subr.bf16.mxu0 0
    %637 = vmatpush1.bf16.msra.mxu0 0
    %638 = vmatprep.subr.bf16.mxu0 0
    %639 = vmatpush1.bf16.msra.mxu0 0
    %640 = vmatprep.subr.bf16.mxu0 0
    %641 = vmatpush1.bf16.msra.mxu0 0
    %642 = vmatprep.subr.bf16.mxu0 0
    %643 = vmatpush1.bf16.msra.mxu0 0
    %644 = vmatprep.subr.bf16.mxu0 0
    %645 = vmatpush1.bf16.msra.mxu0 0
    %646 = vmatprep.subr.bf16.mxu0 0
    %647 = vmatpush1.bf16.msra.mxu0 0
    %648 = vmatprep.mubr.bf16.mxu0 0
    %649 = vmatmul.mubr.bf16.gmra.mrb[0].mxu0 %v614
    %v650 = vpop.f32.mrb[0].mxu0
    %v651 = vadd.f32 0.0, %v650
    %v652 = vpop.f32.mrb[0].mxu0
    %v653 = vpop.f32.mrb[0].mxu0
    %v654 = vpop.f32.mrb[0].mxu0
    %655 = vdwg.mxu0
    %v656 = vadd.f32 %v610, %v651
    %s657 = scalar_lea.vmem [#allocation9], 12
    %v658 = vld [vmem:[%s657] sm:$0xf]
    %v659 = vunpack.c.l.bf16 %v658
    %660 = vrot.lane.b32.xlu0 %v591, 32
    %v661 = vpop.permute.xlu0 %660
    %v663 = vsel %vm115, %v661, 0
    %665 = vmatprep.subr.bf16.mxu0 0
    %666 = vmatpush1.bf16.msra.mxu0 %v170
    %667 = vmatprep.subr.bf16.mxu0 0
    %668 = vmatpush1.bf16.msra.mxu0 %v171
    %669 = vmatprep.subr.bf16.mxu0 0
    %670 = vmatpush1.bf16.msra.mxu0 0
    %671 = vmatprep.subr.bf16.mxu0 0
    %672 = vmatpush1.bf16.msra.mxu0 0
    %673 = vmatprep.subr.bf16.mxu0 0
    %674 = vmatpush1.bf16.msra.mxu0 0
    %675 = vmatprep.subr.bf16.mxu0 0
    %676 = vmatpush1.bf16.msra.mxu0 0
    %677 = vmatprep.subr.bf16.mxu0 0
    %678 = vmatpush1.bf16.msra.mxu0 0
    %679 = vmatprep.subr.bf16.mxu0 0
    %680 = vmatpush1.bf16.msra.mxu0 0
    %681 = vmatprep.subr.bf16.mxu0 0
    %682 = vmatpush1.bf16.msra.mxu0 0
    %683 = vmatprep.subr.bf16.mxu0 0
    %684 = vmatpush1.bf16.msra.mxu0 0
    %685 = vmatprep.subr.bf16.mxu0 0
    %686 = vmatpush1.bf16.msra.mxu0 0
    %687 = vmatprep.subr.bf16.mxu0 0
    %688 = vmatpush1.bf16.msra.mxu0 0
    %689 = vmatprep.subr.bf16.mxu0 0
    %690 = vmatpush1.bf16.msra.mxu0 0
    %691 = vmatprep.subr.bf16.mxu0 0
    %692 = vmatpush1.bf16.msra.mxu0 0
    %693 = vmatprep.subr.bf16.mxu0 0
    %694 = vmatpush1.bf16.msra.mxu0 0
    %695 = vmatprep.subr.bf16.mxu0 0
    %696 = vmatpush1.bf16.msra.mxu0 0
    %697 = vmatprep.mubr.bf16.mxu0 0
    %698 = vmatmul.mubr.bf16.gmra.mrb[0].mxu0 %v663
    %v699 = vpop.f32.mrb[0].mxu0
    %v700 = vadd.f32 0.0, %v699
    %v701 = vpop.f32.mrb[0].mxu0
    %v702 = vpop.f32.mrb[0].mxu0
    %v703 = vpop.f32.mrb[0].mxu0
    %704 = vdwg.mxu0
    %v705 = vadd.f32 %v659, %v700
    %v706 = vmul.f32 %v656, 0.5
    %v707 = vtanh.pop %v706
    %v708 = vadd.f32 %v707, 1.0
    %v709 = vmul.f32 %v708, 0.5
    %v710 = vtanh.pop %v656
    %v711 = vmul.f32 %v709, %v561
    %713 = vrot.lane.b32.xlu0 %v710, 64
    %v714 = vpop.permute.xlu0 %713
    %v716 = vmul.f32 %v709, %v714
    %718 = vrot.lane.b32.xlu0 %v716, 32
    %v719 = vpop.permute.xlu0 %718
    %v721 = vadd.f32 %v711, %v719
    %v722 = vtanh.pop %v721
    %724 = vrot.lane.b32.xlu0 %v722, 64
    %v725 = vpop.permute.xlu0 %724
    %v727 = vmul.f32 %v709, %v725
    %v728 = vmul.f32 %v705, 0.5
    %v729 = vtanh.pop %v728
    %v730 = vadd.f32 %v729, 1.0
    %v731 = vmul.f32 %v730, 0.5
    %v732 = vtanh.pop %v705
    %v733 = vmul.f32 %v731, %v583
    %735 = vrot.lane.b32.xlu0 %v732, 64
    %v736 = vpop.permute.xlu0 %735
    %v738 = vmul.f32 %v731, %v736
    %740 = vrot.lane.b32.xlu0 %v738, 32
    %v741 = vpop.permute.xlu0 %740
    %v743 = vadd.f32 %v733, %v741
    %v744 = vtanh.pop %v743
    %746 = vrot.lane.b32.xlu0 %v744, 64
    %v747 = vpop.permute.xlu0 %746
    %v749 = vmul.f32 %v731, %v747
    %v750 = vpack.c.bf16 %v727, %v727
    %v751 = vpack.c.bf16 %v749, %v749
    %v753 = vunpack.c.l.b16 %v750
    %v754 = vpack.c.b16 %v753, %v753
    %755 = vrot.lane.b32.xlu0 %v754, 32
    %v756 = vpop.permute.xlu0 %755
    %s758 = scalar_lea.vmem [#allocation14], 12
    %759 = vst.msk [vmem:[%s758] sm:$0xf] %vm278, %v756
    %v761 = vunpack.c.l.b16 %v751
    %v762 = vpack.c.b16 %v761, %v761
    %763 = vrot.lane.b32.xlu0 %v762, 32
    %v764 = vpop.permute.xlu0 %763
    %s766 = scalar_lea.vmem [#allocation15], 16
    %767 = vst.msk [vmem:[%s766] sm:$0xf] %vm278, %v764
    %s768 = scalar_lea.vmem [#allocation6], 16
    %v769 = vld [vmem:[%s768] sm:$0xf]
    %v770 = vunpack.c.l.bf16 %v769
    %771 = vrot.lane.b32.xlu0 %v750, 32
    %v772 = vpop.permute.xlu0 %771
    %v774 = vsel %vm115, %v772, 0
    %776 = vmatprep.subr.bf16.mxu0 0
    %777 = vmatpush1.bf16.msra.mxu0 %v111
    %778 = vmatprep.subr.bf16.mxu0 0
    %779 = vmatpush1.bf16.msra.mxu0 %v112
    %780 = vmatprep.subr.bf16.mxu0 0
    %781 = vmatpush1.bf16.msra.mxu0 0
    %782 = vmatprep.subr.bf16.mxu0 0
    %783 = vmatpush1.bf16.msra.mxu0 0
    %784 = vmatprep.subr.bf16.mxu0 0
    %785 = vmatpush1.bf16.msra.mxu0 0
    %786 = vmatprep.subr.bf16.mxu0 0
    %787 = vmatpush1.bf16.msra.mxu0 0
    %788 = vmatprep.subr.bf16.mxu0 0
    %789 = vmatpush1.bf16.msra.mxu0 0
    %790 = vmatprep.subr.bf16.mxu0 0
    %791 = vmatpush1.bf16.msra.mxu0 0
    %792 = vmatprep.subr.bf16.mxu0 0
    %793 = vmatpush1.bf16.msra.mxu0 0
    %794 = vmatprep.subr.bf16.mxu0 0
    %795 = vmatpush1.bf16.msra.mxu0 0
    %796 = vmatprep.subr.bf16.mxu0 0
    %797 = vmatpush1.bf16.msra.mxu0 0
    %798 = vmatprep.subr.bf16.mxu0 0
    %799 = vmatpush1.bf16.msra.mxu0 0
    %800 = vmatprep.subr.bf16.mxu0 0
    %801 = vmatpush1.bf16.msra.mxu0 0
    %802 = vmatprep.subr.bf16.mxu0 0
    %803 = vmatpush1.bf16.msra.mxu0 0
    %804 = vmatprep.subr.bf16.mxu0 0
    %805 = vmatpush1.bf16.msra.mxu0 0
    %806 = vmatprep.subr.bf16.mxu0 0
    %807 = vmatpush1.bf16.msra.mxu0 0
    %808 = vmatprep.mubr.bf16.mxu0 0
    %809 = vmatmul.mubr.bf16.gmra.mrb[0].mxu0 %v774
    %v810 = vpop.f32.mrb[0].mxu0
    %v811 = vadd.f32 0.0, %v810
    %v812 = vpop.f32.mrb[0].mxu0
    %v813 = vpop.f32.mrb[0].mxu0
    %v814 = vpop.f32.mrb[0].mxu0
    %815 = vdwg.mxu0
    %v816 = vadd.f32 %v770, %v811
    %s817 = scalar_lea.vmem [#allocation9], 16
    %v818 = vld [vmem:[%s817] sm:$0xf]
    %v819 = vunpack.c.l.bf16 %v818
    %820 = vrot.lane.b32.xlu0 %v751, 32
    %v821 = vpop.permute.xlu0 %820
    %v823 = vsel %vm115, %v821, 0
    %825 = vmatprep.subr.bf16.mxu0 0
    %826 = vmatpush1.bf16.msra.mxu0 %v170
    %827 = vmatprep.subr.bf16.mxu0 0
    %828 = vmatpush1.bf16.msra.mxu0 %v171
    %829 = vmatprep.subr.bf16.mxu0 0
    %830 = vmatpush1.bf16.msra.mxu0 0
    %831 = vmatprep.subr.bf16.mxu0 0
    %832 = vmatpush1.bf16.msra.mxu0 0
    %833 = vmatprep.subr.bf16.mxu0 0
    %834 = vmatpush1.bf16.msra.mxu0 0
    %835 = vmatprep.subr.bf16.mxu0 0
    %836 = vmatpush1.bf16.msra.mxu0 0
    %837 = vmatprep.subr.bf16.mxu0 0
    %838 = vmatpush1.bf16.msra.mxu0 0
    %839 = vmatprep.subr.bf16.mxu0 0
    %840 = vmatpush1.bf16.msra.mxu0 0
    %841 = vmatprep.subr.bf16.mxu0 0
    %842 = vmatpush1.bf16.msra.mxu0 0
    %843 = vmatprep.subr.bf16.mxu0 0
    %844 = vmatpush1.bf16.msra.mxu0 0
    %845 = vmatprep.subr.bf16.mxu0 0
    %846 = vmatpush1.bf16.msra.mxu0 0
    %847 = vmatprep.subr.bf16.mxu0 0
    %848 = vmatpush1.bf16.msra.mxu0 0
    %849 = vmatprep.subr.bf16.mxu0 0
    %850 = vmatpush1.bf16.msra.mxu0 0
    %851 = vmatprep.subr.bf16.mxu0 0
    %852 = vmatpush1.bf16.msra.mxu0 0
    %853 = vmatprep.subr.bf16.mxu0 0
    %854 = vmatpush1.bf16.msra.mxu0 0
    %855 = vmatprep.subr.bf16.mxu0 0
    %856 = vmatpush1.bf16.msra.mxu0 0
    %857 = vmatprep.mubr.bf16.mxu0 0
    %858 = vmatmul.mubr.bf16.gmra.mrb[0].mxu0 %v823
    %v859 = vpop.f32.mrb[0].mxu0
    %v860 = vadd.f32 0.0, %v859
    %v861 = vpop.f32.mrb[0].mxu0
    %v862 = vpop.f32.mrb[0].mxu0
    %v863 = vpop.f32.mrb[0].mxu0
    %864 = vdwg.mxu0
    %v865 = vadd.f32 %v819, %v860
    %v866 = vmul.f32 %v816, 0.5
    %v867 = vtanh.pop %v866
    %v868 = vadd.f32 %v867, 1.0
    %v869 = vmul.f32 %v868, 0.5
    %v870 = vtanh.pop %v816
    %v871 = vmul.f32 %v869, %v721
    %873 = vrot.lane.b32.xlu0 %v870, 64
    %v874 = vpop.permute.xlu0 %873
    %v876 = vmul.f32 %v869, %v874
    %878 = vrot.lane.b32.xlu0 %v876, 32
    %v879 = vpop.permute.xlu0 %878
    %v881 = vadd.f32 %v871, %v879
    %v882 = vtanh.pop %v881
    %884 = vrot.lane.b32.xlu0 %v882, 64
    %v885 = vpop.permute.xlu0 %884
    %v887 = vmul.f32 %v869, %v885
    %v888 = vmul.f32 %v865, 0.5
    %v889 = vtanh.pop %v888
    %v890 = vadd.f32 %v889, 1.0
    %v891 = vmul.f32 %v890, 0.5
    %v892 = vtanh.pop %v865
    %v893 = vmul.f32 %v891, %v743
    %895 = vrot.lane.b32.xlu0 %v892, 64
    %v896 = vpop.permute.xlu0 %895
    %v898 = vmul.f32 %v891, %v896
    %900 = vrot.lane.b32.xlu0 %v898, 32
    %v901 = vpop.permute.xlu0 %900
    %v903 = vadd.f32 %v893, %v901
    %v904 = vtanh.pop %v903
    %906 = vrot.lane.b32.xlu0 %v904, 64
    %v907 = vpop.permute.xlu0 %906
    %v909 = vmul.f32 %v891, %v907
    %v910 = vpack.c.bf16 %v887, %v887
    %v911 = vpack.c.bf16 %v909, %v909
    %v913 = vunpack.c.l.b16 %v910
    %v914 = vpack.c.b16 %v913, %v913
    %915 = vrot.lane.b32.xlu0 %v914, 32
    %v916 = vpop.permute.xlu0 %915
    %s918 = scalar_lea.vmem [#allocation14], 16
    %919 = vst.msk [vmem:[%s918] sm:$0xf] %vm278, %v916
    %v921 = vunpack.c.l.b16 %v911
    %v922 = vpack.c.b16 %v921, %v921
    %923 = vrot.lane.b32.xlu0 %v922, 32
    %v924 = vpop.permute.xlu0 %923
    %s926 = scalar_lea.vmem [#allocation15], 12
    %927 = vst.msk [vmem:[%s926] sm:$0xf] %vm278, %v924
    %s928 = scalar_lea.vmem [#allocation6], 20
    %v929 = vld [vmem:[%s928] sm:$0xf]
    %v930 = vunpack.c.l.bf16 %v929
    %931 = vrot.lane.b32.xlu0 %v910, 32
    %v932 = vpop.permute.xlu0 %931
    %v934 = vsel %vm115, %v932, 0
    %936 = vmatprep.subr.bf16.mxu0 0
    %937 = vmatpush1.bf16.msra.mxu0 %v111
    %938 = vmatprep.subr.bf16.mxu0 0
    %939 = vmatpush1.bf16.msra.mxu0 %v112
    %940 = vmatprep.subr.bf16.mxu0 0
    %941 = vmatpush1.bf16.msra.mxu0 0
    %942 = vmatprep.subr.bf16.mxu0 0
    %943 = vmatpush1.bf16.msra.mxu0 0
    %944 = vmatprep.subr.bf16.mxu0 0
    %945 = vmatpush1.bf16.msra.mxu0 0
    %946 = vmatprep.subr.bf16.mxu0 0
    %947 = vmatpush1.bf16.msra.mxu0 0
    %948 = vmatprep.subr.bf16.mxu0 0
    %949 = vmatpush1.bf16.msra.mxu0 0
    %950 = vmatprep.subr.bf16.mxu0 0
    %951 = vmatpush1.bf16.msra.mxu0 0
    %952 = vmatprep.subr.bf16.mxu0 0
    %953 = vmatpush1.bf16.msra.mxu0 0
    %954 = vmatprep.subr.bf16.mxu0 0
    %955 = vmatpush1.bf16.msra.mxu0 0
    %956 = vmatprep.subr.bf16.mxu0 0
    %957 = vmatpush1.bf16.msra.mxu0 0
    %958 = vmatprep.subr.bf16.mxu0 0
    %959 = vmatpush1.bf16.msra.mxu0 0
    %960 = vmatprep.subr.bf16.mxu0 0
    %961 = vmatpush1.bf16.msra.mxu0 0
    %962 = vmatprep.subr.bf16.mxu0 0
    %963 = vmatpush1.bf16.msra.mxu0 0
    %964 = vmatprep.subr.bf16.mxu0 0
    %965 = vmatpush1.bf16.msra.mxu0 0
    %966 = vmatprep.subr.bf16.mxu0 0
    %967 = vmatpush1.bf16.msra.mxu0 0
    %968 = vmatprep.mubr.bf16.mxu0 0
    %969 = vmatmul.mubr.bf16.gmra.mrb[0].mxu0 %v934
    %v970 = vpop.f32.mrb[0].mxu0
    %v971 = vadd.f32 0.0, %v970
    %v972 = vpop.f32.mrb[0].mxu0
    %v973 = vpop.f32.mrb[0].mxu0
    %v974 = vpop.f32.mrb[0].mxu0
    %975 = vdwg.mxu0
    %v976 = vadd.f32 %v930, %v971
    %s977 = scalar_lea.vmem [#allocation9], 20
    %v978 = vld [vmem:[%s977] sm:$0xf]
    %v979 = vunpack.c.l.bf16 %v978
    %980 = vrot.lane.b32.xlu0 %v911, 32
    %v981 = vpop.permute.xlu0 %980
    %v983 = vsel %vm115, %v981, 0
    %985 = vmatprep.subr.bf16.mxu0 0
    %986 = vmatpush1.bf16.msra.mxu0 %v170
    %987 = vmatprep.subr.bf16.mxu0 0
    %988 = vmatpush1.bf16.msra.mxu0 %v171
    %989 = vmatprep.subr.bf16.mxu0 0
    %990 = vmatpush1.bf16.msra.mxu0 0
    %991 = vmatprep.subr.bf16.mxu0 0
    %992 = vmatpush1.bf16.msra.mxu0 0
    %993 = vmatprep.subr.bf16.mxu0 0
    %994 = vmatpush1.bf16.msra.mxu0 0
    %995 = vmatprep.subr.bf16.mxu0 0
    %996 = vmatpush1.bf16.msra.mxu0 0
    %997 = vmatprep.subr.bf16.mxu0 0
    %998 = vmatpush1.bf16.msra.mxu0 0
    %999 = vmatprep.subr.bf16.mxu0 0
    %1000 = vmatpush1.bf16.msra.mxu0 0
    %1001 = vmatprep.subr.bf16.mxu0 0
    %1002 = vmatpush1.bf16.msra.mxu0 0
    %1003 = vmatprep.subr.bf16.mxu0 0
    %1004 = vmatpush1.bf16.msra.mxu0 0
    %1005 = vmatprep.subr.bf16.mxu0 0
    %1006 = vmatpush1.bf16.msra.mxu0 0
    %1007 = vmatprep.subr.bf16.mxu0 0
    %1008 = vmatpush1.bf16.msra.mxu0 0
    %1009 = vmatprep.subr.bf16.mxu0 0
    %1010 = vmatpush1.bf16.msra.mxu0 0
    %1011 = vmatprep.subr.bf16.mxu0 0
    %1012 = vmatpush1.bf16.msra.mxu0 0
    %1013 = vmatprep.subr.bf16.mxu0 0
    %1014 = vmatpush1.bf16.msra.mxu0 0
    %1015 = vmatprep.subr.bf16.mxu0 0
    %1016 = vmatpush1.bf16.msra.mxu0 0
    %1017 = vmatprep.mubr.bf16.mxu0 0
    %1018 = vmatmul.mubr.bf16.gmra.mrb[0].mxu0 %v983
    %v1019 = vpop.f32.mrb[0].mxu0
    %v1020 = vadd.f32 0.0, %v1019
    %v1021 = vpop.f32.mrb[0].mxu0
    %v1022 = vpop.f32.mrb[0].mxu0
    %v1023 = vpop.f32.mrb[0].mxu0
    %1024 = vdwg.mxu0
    %v1025 = vadd.f32 %v979, %v1020
    %v1026 = vmul.f32 %v976, 0.5
    %v1027 = vtanh.pop %v1026
    %v1028 = vadd.f32 %v1027, 1.0
    %v1029 = vmul.f32 %v1028, 0.5
    %v1030 = vtanh.pop %v976
    %v1031 = vmul.f32 %v1029, %v881
    %1033 = vrot.lane.b32.xlu0 %v1030, 64
    %v1034 = vpop.permute.xlu0 %1033
    %v1036 = vmul.f32 %v1029, %v1034
    %1038 = vrot.lane.b32.xlu0 %v1036, 32
    %v1039 = vpop.permute.xlu0 %1038
    %v1041 = vadd.f32 %v1031, %v1039
    %v1042 = vtanh.pop %v1041
    %1044 = vrot.lane.b32.xlu0 %v1042, 64
    %v1045 = vpop.permute.xlu0 %1044
    %v1047 = vmul.f32 %v1029, %v1045
    %v1048 = vmul.f32 %v1025, 0.5
    %v1049 = vtanh.pop %v1048
    %v1050 = vadd.f32 %v1049, 1.0
    %v1051 = vmul.f32 %v1050, 0.5
    %v1052 = vtanh.pop %v1025
    %v1053 = vmul.f32 %v1051, %v903
    %1055 = vrot.lane.b32.xlu0 %v1052, 64
    %v1056 = vpop.permute.xlu0 %1055
    %v1058 = vmul.f32 %v1051, %v1056
    %1060 = vrot.lane.b32.xlu0 %v1058, 32
    %v1061 = vpop.permute.xlu0 %1060
    %v1063 = vadd.f32 %v1053, %v1061
    %v1064 = vtanh.pop %v1063
    %1066 = vrot.lane.b32.xlu0 %v1064, 64
    %v1067 = vpop.permute.xlu0 %1066
    %v1069 = vmul.f32 %v1051, %v1067
    %v1070 = vpack.c.bf16 %v1047, %v1047
    %v1071 = vpack.c.bf16 %v1069, %v1069
    %v1073 = vunpack.c.l.b16 %v1070
    %v1074 = vpack.c.b16 %v1073, %v1073
    %1075 = vrot.lane.b32.xlu0 %v1074, 32
    %v1076 = vpop.permute.xlu0 %1075
    %s1078 = scalar_lea.vmem [#allocation14], 20
    %1079 = vst.msk [vmem:[%s1078] sm:$0xf] %vm278, %v1076
    %v1081 = vunpack.c.l.b16 %v1071
    %v1082 = vpack.c.b16 %v1081, %v1081
    %1083 = vrot.lane.b32.xlu0 %v1082, 32
    %v1084 = vpop.permute.xlu0 %1083
    %s1086 = scalar_lea.vmem [#allocation15], 8
    %1087 = vst.msk [vmem:[%s1086] sm:$0xf] %vm278, %v1084
    %s1088 = scalar_lea.vmem [#allocation6], 24
    %v1089 = vld [vmem:[%s1088] sm:$0xf]
    %v1090 = vunpack.c.l.bf16 %v1089
    %1091 = vrot.lane.b32.xlu0 %v1070, 32
    %v1092 = vpop.permute.xlu0 %1091
    %v1094 = vsel %vm115, %v1092, 0
    %1096 = vmatprep.subr.bf16.mxu0 0
    %1097 = vmatpush1.bf16.msra.mxu0 %v111
    %1098 = vmatprep.subr.bf16.mxu0 0
    %1099 = vmatpush1.bf16.msra.mxu0 %v112
    %1100 = vmatprep.subr.bf16.mxu0 0
    %1101 = vmatpush1.bf16.msra.mxu0 0
    %1102 = vmatprep.subr.bf16.mxu0 0
    %1103 = vmatpush1.bf16.msra.mxu0 0
    %1104 = vmatprep.subr.bf16.mxu0 0
    %1105 = vmatpush1.bf16.msra.mxu0 0
    %1106 = vmatprep.subr.bf16.mxu0 0
    %1107 = vmatpush1.bf16.msra.mxu0 0
    %1108 = vmatprep.subr.bf16.mxu0 0
    %1109 = vmatpush1.bf16.msra.mxu0 0
    %1110 = vmatprep.subr.bf16.mxu0 0
    %1111 = vmatpush1.bf16.msra.mxu0 0
    %1112 = vmatprep.subr.bf16.mxu0 0
    %1113 = vmatpush1.bf16.msra.mxu0 0
    %1114 = vmatprep.subr.bf16.mxu0 0
    %1115 = vmatpush1.bf16.msra.mxu0 0
    %1116 = vmatprep.subr.bf16.mxu0 0
    %1117 = vmatpush1.bf16.msra.mxu0 0
    %1118 = vmatprep.subr.bf16.mxu0 0
    %1119 = vmatpush1.bf16.msra.mxu0 0
    %1120 = vmatprep.subr.bf16.mxu0 0
    %1121 = vmatpush1.bf16.msra.mxu0 0
    %1122 = vmatprep.subr.bf16.mxu0 0
    %1123 = vmatpush1.bf16.msra.mxu0 0
    %1124 = vmatprep.subr.bf16.mxu0 0
    %1125 = vmatpush1.bf16.msra.mxu0 0
    %1126 = vmatprep.subr.bf16.mxu0 0
    %1127 = vmatpush1.bf16.msra.mxu0 0
    %1128 = vmatprep.mubr.bf16.mxu0 0
    %1129 = vmatmul.mubr.bf16.gmra.mrb[0].mxu0 %v1094
    %v1130 = vpop.f32.mrb[0].mxu0
    %v1131 = vadd.f32 0.0, %v1130
    %v1132 = vpop.f32.mrb[0].mxu0
    %v1133 = vpop.f32.mrb[0].mxu0
    %v1134 = vpop.f32.mrb[0].mxu0
    %1135 = vdwg.mxu0
    %v1136 = vadd.f32 %v1090, %v1131
    %s1137 = scalar_lea.vmem [#allocation9], 24
    %v1138 = vld [vmem:[%s1137] sm:$0xf]
    %v1139 = vunpack.c.l.bf16 %v1138
    %1140 = vrot.lane.b32.xlu0 %v1071, 32
    %v1141 = vpop.permute.xlu0 %1140
    %v1143 = vsel %vm115, %v1141, 0
    %1145 = vmatprep.subr.bf16.mxu0 0
    %1146 = vmatpush1.bf16.msra.mxu0 %v170
    %1147 = vmatprep.subr.bf16.mxu0 0
    %1148 = vmatpush1.bf16.msra.mxu0 %v171
    %1149 = vmatprep.subr.bf16.mxu0 0
    %1150 = vmatpush1.bf16.msra.mxu0 0
    %1151 = vmatprep.subr.bf16.mxu0 0
    %1152 = vmatpush1.bf16.msra.mxu0 0
    %1153 = vmatprep.subr.bf16.mxu0 0
    %1154 = vmatpush1.bf16.msra.mxu0 0
    %1155 = vmatprep.subr.bf16.mxu0 0
    %1156 = vmatpush1.bf16.msra.mxu0 0
    %1157 = vmatprep.subr.bf16.mxu0 0
    %1158 = vmatpush1.bf16.msra.mxu0 0
    %1159 = vmatprep.subr.bf16.mxu0 0
    %1160 = vmatpush1.bf16.msra.mxu0 0
    %1161 = vmatprep.subr.bf16.mxu0 0
    %1162 = vmatpush1.bf16.msra.mxu0 0
    %1163 = vmatprep.subr.bf16.mxu0 0
    %1164 = vmatpush1.bf16.msra.mxu0 0
    %1165 = vmatprep.subr.bf16.mxu0 0
    %1166 = vmatpush1.bf16.msra.mxu0 0
    %1167 = vmatprep.subr.bf16.mxu0 0
    %1168 = vmatpush1.bf16.msra.mxu0 0
    %1169 = vmatprep.subr.bf16.mxu0 0
    %1170 = vmatpush1.bf16.msra.mxu0 0
    %1171 = vmatprep.subr.bf16.mxu0 0
    %1172 = vmatpush1.bf16.msra.mxu0 0
    %1173 = vmatprep.subr.bf16.mxu0 0
    %1174 = vmatpush1.bf16.msra.mxu0 0
    %1175 = vmatprep.subr.bf16.mxu0 0
    %1176 = vmatpush1.bf16.msra.mxu0 0
    %1177 = vmatprep.mubr.bf16.mxu0 0
    %1178 = vmatmul.mubr.bf16.gmra.mrb[0].mxu0 %v1143
    %v1179 = vpop.f32.mrb[0].mxu0
    %v1180 = vadd.f32 0.0, %v1179
    %v1181 = vpop.f32.mrb[0].mxu0
    %v1182 = vpop.f32.mrb[0].mxu0
    %v1183 = vpop.f32.mrb[0].mxu0
    %1184 = vdwg.mxu0
    %v1185 = vadd.f32 %v1139, %v1180
    %v1186 = vmul.f32 %v1136, 0.5
    %v1187 = vtanh.pop %v1186
    %v1188 = vadd.f32 %v1187, 1.0
    %v1189 = vmul.f32 %v1188, 0.5
    %v1190 = vtanh.pop %v1136
    %v1191 = vmul.f32 %v1189, %v1041
    %1193 = vrot.lane.b32.xlu0 %v1190, 64
    %v1194 = vpop.permute.xlu0 %1193
    %v1196 = vmul.f32 %v1189, %v1194
    %1198 = vrot.lane.b32.xlu0 %v1196, 32
    %v1199 = vpop.permute.xlu0 %1198
    %v1201 = vadd.f32 %v1191, %v1199
    %v1202 = vtanh.pop %v1201
    %1204 = vrot.lane.b32.xlu0 %v1202, 64
    %v1205 = vpop.permute.xlu0 %1204
    %v1207 = vmul.f32 %v1189, %v1205
    %v1208 = vmul.f32 %v1185, 0.5
    %v1209 = vtanh.pop %v1208
    %v1210 = vadd.f32 %v1209, 1.0
    %v1211 = vmul.f32 %v1210, 0.5
    %v1212 = vtanh.pop %v1185
    %v1213 = vmul.f32 %v1211, %v1063
    %1215 = vrot.lane.b32.xlu0 %v1212, 64
    %v1216 = vpop.permute.xlu0 %1215
    %v1218 = vmul.f32 %v1211, %v1216
    %1220 = vrot.lane.b32.xlu0 %v1218, 32
    %v1221 = vpop.permute.xlu0 %1220
    %v1223 = vadd.f32 %v1213, %v1221
    %v1224 = vtanh.pop %v1223
    %1226 = vrot.lane.b32.xlu0 %v1224, 64
    %v1227 = vpop.permute.xlu0 %1226
    %v1229 = vmul.f32 %v1211, %v1227
    %v1230 = vpack.c.bf16 %v1207, %v1207
    %v1231 = vpack.c.bf16 %v1229, %v1229
    %v1233 = vunpack.c.l.b16 %v1230
    %v1234 = vpack.c.b16 %v1233, %v1233
    %1235 = vrot.lane.b32.xlu0 %v1234, 32
    %v1236 = vpop.permute.xlu0 %1235
    %s1238 = scalar_lea.vmem [#allocation14], 24
    %1239 = vst.msk [vmem:[%s1238] sm:$0xf] %vm278, %v1236
    %v1241 = vunpack.c.l.b16 %v1231
    %v1242 = vpack.c.b16 %v1241, %v1241
    %1243 = vrot.lane.b32.xlu0 %v1242, 32
    %v1244 = vpop.permute.xlu0 %1243
    %s1246 = scalar_lea.vmem [#allocation15], 4
    %1247 = vst.msk [vmem:[%s1246] sm:$0xf] %vm278, %v1244
    %s1248 = scalar_lea.vmem [#allocation6], 28
    %v1249 = vld [vmem:[%s1248] sm:$0xf]
    %v1250 = vunpack.c.l.bf16 %v1249
    %1251 = vrot.lane.b32.xlu0 %v1230, 32
    %v1252 = vpop.permute.xlu0 %1251
    %v1254 = vsel %vm115, %v1252, 0
    %1256 = vmatprep.subr.bf16.mxu0 0
    %1257 = vmatpush1.bf16.msra.mxu0 %v111
    %1258 = vmatprep.subr.bf16.mxu0 0
    %1259 = vmatpush1.bf16.msra.mxu0 %v112
    %1260 = vmatprep.subr.bf16.mxu0 0
    %1261 = vmatpush1.bf16.msra.mxu0 0
    %1262 = vmatprep.subr.bf16.mxu0 0
    %1263 = vmatpush1.bf16.msra.mxu0 0
    %1264 = vmatprep.subr.bf16.mxu0 0
    %1265 = vmatpush1.bf16.msra.mxu0 0
    %1266 = vmatprep.subr.bf16.mxu0 0
    %1267 = vmatpush1.bf16.msra.mxu0 0
    %1268 = vmatprep.subr.bf16.mxu0 0
    %1269 = vmatpush1.bf16.msra.mxu0 0
    %1270 = vmatprep.subr.bf16.mxu0 0
    %1271 = vmatpush1.bf16.msra.mxu0 0
    %1272 = vmatprep.subr.bf16.mxu0 0
    %1273 = vmatpush1.bf16.msra.mxu0 0
    %1274 = vmatprep.subr.bf16.mxu0 0
    %1275 = vmatpush1.bf16.msra.mxu0 0
    %1276 = vmatprep.subr.bf16.mxu0 0
    %1277 = vmatpush1.bf16.msra.mxu0 0
    %1278 = vmatprep.subr.bf16.mxu0 0
    %1279 = vmatpush1.bf16.msra.mxu0 0
    %1280 = vmatprep.subr.bf16.mxu0 0
    %1281 = vmatpush1.bf16.msra.mxu0 0
    %1282 = vmatprep.subr.bf16.mxu0 0
    %1283 = vmatpush1.bf16.msra.mxu0 0
    %1284 = vmatprep.subr.bf16.mxu0 0
    %1285 = vmatpush1.bf16.msra.mxu0 0
    %1286 = vmatprep.subr.bf16.mxu0 0
    %1287 = vmatpush1.bf16.msra.mxu0 0
    %1288 = vmatprep.mubr.bf16.mxu0 0
    %1289 = vmatmul.mubr.bf16.gmra.mrb[0].mxu0 %v1254
    %v1290 = vpop.f32.mrb[0].mxu0
    %v1291 = vadd.f32 0.0, %v1290
    %v1292 = vpop.f32.mrb[0].mxu0
    %v1293 = vpop.f32.mrb[0].mxu0
    %v1294 = vpop.f32.mrb[0].mxu0
    %1295 = vdwg.mxu0
    %v1296 = vadd.f32 %v1250, %v1291
    %s1297 = scalar_lea.vmem [#allocation9], 28
    %v1298 = vld [vmem:[%s1297] sm:$0xf]
    %v1299 = vunpack.c.l.bf16 %v1298
    %1300 = vrot.lane.b32.xlu0 %v1231, 32
    %v1301 = vpop.permute.xlu0 %1300
    %v1303 = vsel %vm115, %v1301, 0
    %1305 = vmatprep.subr.bf16.mxu0 0
    %1306 = vmatpush1.bf16.msra.mxu0 %v170
    %1307 = vmatprep.subr.bf16.mxu0 0
    %1308 = vmatpush1.bf16.msra.mxu0 %v171
    %1309 = vmatprep.subr.bf16.mxu0 0
    %1310 = vmatpush1.bf16.msra.mxu0 0
    %1311 = vmatprep.subr.bf16.mxu0 0
    %1312 = vmatpush1.bf16.msra.mxu0 0
    %1313 = vmatprep.subr.bf16.mxu0 0
    %1314 = vmatpush1.bf16.msra.mxu0 0
    %1315 = vmatprep.subr.bf16.mxu0 0
    %1316 = vmatpush1.bf16.msra.mxu0 0
    %1317 = vmatprep.subr.bf16.mxu0 0
    %1318 = vmatpush1.bf16.msra.mxu0 0
    %1319 = vmatprep.subr.bf16.mxu0 0
    %1320 = vmatpush1.bf16.msra.mxu0 0
    %1321 = vmatprep.subr.bf16.mxu0 0
    %1322 = vmatpush1.bf16.msra.mxu0 0
    %1323 = vmatprep.subr.bf16.mxu0 0
    %1324 = vmatpush1.bf16.msra.mxu0 0
    %1325 = vmatprep.subr.bf16.mxu0 0
    %1326 = vmatpush1.bf16.msra.mxu0 0
    %1327 = vmatprep.subr.bf16.mxu0 0
    %1328 = vmatpush1.bf16.msra.mxu0 0
    %1329 = vmatprep.subr.bf16.mxu0 0
    %1330 = vmatpush1.bf16.msra.mxu0 0
    %1331 = vmatprep.subr.bf16.mxu0 0
    %1332 = vmatpush1.bf16.msra.mxu0 0
    %1333 = vmatprep.subr.bf16.mxu0 0
    %1334 = vmatpush1.bf16.msra.mxu0 0
    %1335 = vmatprep.subr.bf16.mxu0 0
    %1336 = vmatpush1.bf16.msra.mxu0 0
    %1337 = vmatprep.mubr.bf16.mxu0 0
    %1338 = vmatmul.mubr.bf16.gmra.mrb[0].mxu0 %v1303
    %v1339 = vpop.f32.mrb[0].mxu0
    %v1340 = vadd.f32 0.0, %v1339
    %v1341 = vpop.f32.mrb[0].mxu0
    %v1342 = vpop.f32.mrb[0].mxu0
    %v1343 = vpop.f32.mrb[0].mxu0
    %1344 = vdwg.mxu0
    %v1345 = vadd.f32 %v1299, %v1340
    %v1346 = vmul.f32 %v1296, 0.5
    %v1347 = vtanh.pop %v1346
    %v1348 = vadd.f32 %v1347, 1.0
    %v1349 = vmul.f32 %v1348, 0.5
    %v1350 = vtanh.pop %v1296
    %v1351 = vmul.f32 %v1349, %v1201
    %1353 = vrot.lane.b32.xlu0 %v1350, 64
    %v1354 = vpop.permute.xlu0 %1353
    %v1356 = vmul.f32 %v1349, %v1354
    %1358 = vrot.lane.b32.xlu0 %v1356, 32
    %v1359 = vpop.permute.xlu0 %1358
    %v1361 = vadd.f32 %v1351, %v1359
    %v1362 = vtanh.pop %v1361
    %1364 = vrot.lane.b32.xlu0 %v1362, 64
    %v1365 = vpop.permute.xlu0 %1364
    %v1367 = vmul.f32 %v1349, %v1365
    %v1368 = vmul.f32 %v1345, 0.5
    %v1369 = vtanh.pop %v1368
    %v1370 = vadd.f32 %v1369, 1.0
    %v1371 = vmul.f32 %v1370, 0.5
    %v1372 = vtanh.pop %v1345
    %v1373 = vmul.f32 %v1371, %v1223
    %1375 = vrot.lane.b32.xlu0 %v1372, 64
    %v1376 = vpop.permute.xlu0 %1375
    %v1378 = vmul.f32 %v1371, %v1376
    %1380 = vrot.lane.b32.xlu0 %v1378, 32
    %v1381 = vpop.permute.xlu0 %1380
    %v1383 = vadd.f32 %v1373, %v1381
    %v1384 = vtanh.pop %v1383
    %1386 = vrot.lane.b32.xlu0 %v1384, 64
    %v1387 = vpop.permute.xlu0 %1386
    %v1389 = vmul.f32 %v1371, %v1387
    %v1390 = vpack.c.bf16 %v1367, %v1367
    %v1391 = vpack.c.bf16 %v1389, %v1389
    %v1393 = vunpack.c.l.b16 %v1390
    %v1394 = vpack.c.b16 %v1393, %v1393
    %1395 = vrot.lane.b32.xlu0 %v1394, 32
    %v1396 = vpop.permute.xlu0 %1395
    %s1398 = scalar_lea.vmem [#allocation14], 28
    %1399 = vst.msk [vmem:[%s1398] sm:$0xf] %vm278, %v1396
    %v1401 = vunpack.c.l.b16 %v1391
    %v1402 = vpack.c.b16 %v1401, %v1401
    %1403 = vrot.lane.b32.xlu0 %v1402, 32
    %v1404 = vpop.permute.xlu0 %1403
    %1406 = vst.msk [vmem:[#allocation15] sm:$0xf] %vm278, %v1404
    %1407 = vst.msk [vmem:[#allocation2] sm:$0xf] %vm278, %v1396
    %1408 = vst.msk [vmem:[#allocation3] sm:$0xf] %vm278, %v1404
    %1410 = vrot.lane.b32.xlu0 %v1361, 96
    %v1411 = vpop.permute.xlu0 %1410
    %1413 = vst.msk [vmem:[#allocation4] sm:$0xff] %vm115, %v1411
    %1415 = vrot.lane.b32.xlu0 %v1383, 96
    %v1416 = vpop.permute.xlu0 %1415
    %1418 = vst.msk [vmem:[#allocation5] sm:$0xff] %vm115, %v1416
    // Predicated region
    $region38: #{tpu_custom_call.1} parent=1 // pred_check
      _
    $region39: #{tpu_custom_call.1} parent=1 // pred_check_branch
      %1420 = sbr.rel (0) target = $region41
    $region40: #{tpu_custom_call.1} parent=1 // pred_region
      %s1422 = ssub.s32 512, 512
      %1423 = vsyncadd [#allocation8], %s1422
      %s1424 = sshll.u32 [#allocation14], 4
      %s1425 = int_to_ptr.vmem [resolvable:$true] %s1424
      %1430 = dma.vmem_to_hbm [thread:$0]  %s1425, 512, %s4, [#allocation8], 64, 64, 4
    $region41: #{tpu_custom_call.1} parent=1 // pred_fallthru
      _
    // Predicated region
    $region42: #{tpu_custom_call.1} parent=1 // pred_check
      _
    $region43: #{tpu_custom_call.1} parent=1 // pred_check_branch
      %1432 = sbr.rel (0) target = $region45
    $region44: #{tpu_custom_call.1} parent=1 // pred_region
      %s1433 = ssub.s32 0, 0
      %s1434 = smul.u32 8, %s1433
      %s1436 = ssub.s32 512, 512
      %1437 = vsyncadd [#allocation16], %s1436
      %s1438 = smul.addr %s1434, 64
      %s1439 = scalar_lea.hbm %s5, %s1438
      %s1440 = sshll.u32 [#allocation15], 4
      %s1441 = int_to_ptr.vmem [resolvable:$true] %s1440
      %1446 = dma.vmem_to_hbm [thread:$0]  %s1441, 512, %s1439, [#allocation16], 64, 64, 4
    $region45: #{tpu_custom_call.1} parent=1 // pred_fallthru
      _
    // Predicated region
    $region46: #{tpu_custom_call.1} parent=1 // pred_check
      _
    $region47: #{tpu_custom_call.1} parent=1 // pred_check_branch
      %1448 = sbr.rel (0) target = $region49
    $region48: #{tpu_custom_call.1} parent=1 // pred_region
      %1449 = dma.done [#allocation8], 512
    $region49: #{tpu_custom_call.1} parent=1 // pred_fallthru
      _
    // Predicated region
    $region50: #{tpu_custom_call.1} parent=1 // pred_check
      _
    $region51: #{tpu_custom_call.1} parent=1 // pred_check_branch
      %1451 = sbr.rel (0) target = $region53
    $region52: #{tpu_custom_call.1} parent=1 // pred_region
      %1452 = dma.done [#allocation16], 512
    $region53: #{tpu_custom_call.1} parent=1 // pred_fallthru
      _
    %1453 = vsyncpa [#allocation7], 1
    %1454 = vsyncpa [#allocation10], 1
    %1455 = vsyncpa [#allocation13], 1
    %1456 = vsyncpa [#allocation8], 1
    %1457 = vsyncpa [#allocation16], 1

</llo_original>
